<compile_context>
chip_gen: v7x
topology: tpu7x:2x2x1
jax: 0.10.0
libtpu: 0.0.40
codegen_flags: <defaults>
</compile_context>

<pallas_src>
import functools

import jax
import jax.numpy as jnp
import numpy as np
from jax import lax
from jax.experimental import pallas as pl
from jax.experimental.pallas import tpu as pltpu

_OUT_LANES = 128


def _chamfer_kernel(pts_lhs_ref, pts_s_ref, planes_ref, out_ref, *,
                    n_batch, n_heads, inv_bn):
    """pts_lhs_ref: (B, N, 8) rows [x, y, z, p2, 1, 0, 0, 0]  (MXU lhs)
       pts_s_ref:   (B, 8, N) coords on sublanes, points lane-dense
       planes_ref:  (B, C*4) SMEM, per head [ux, uy, uz, off] (unit normals)
       out_ref:     (1, 128) lane-dense scalar result (broadcast)."""
    n = pts_s_ref.shape[2]

    # (8, 1) sublane masks used to assemble the augmented reflected points.
    kidx = lax.broadcasted_iota(jnp.int32, (8, 1), 0)
    e0 = (kidx == 0).astype(jnp.float32)
    e1 = (kidx == 1).astype(jnp.float32)
    e2 = (kidx == 2).astype(jnp.float32)
    e3 = (kidx == 3).astype(jnp.float32)
    e4 = (kidx == 4).astype(jnp.float32)
    scale_col = jnp.where(kidx < 3, jnp.float32(-2.0), jnp.float32(0.0))

    fwd_acc = jnp.zeros((n, 1), jnp.float32)             # sum_{b,c} row-mins
    bwd_acc = jnp.zeros((1, n_heads * n), jnp.float32)   # sum_{b} col-mins

    for b in range(n_batch):          # B is tiny & static: full unroll
        pts_lhs = pts_lhs_ref[b]      # (N, 8)
        pts_s = pts_s_ref[b]          # (8, N), rows >= 3 are zero

        # Reflect the points through every plane (C unrolled, all VPU work is
        # full-lane), building one (8, C*N) RHS for a single MXU matmul.
        cols = []
        for c in range(n_heads):
            base = c * 4
            ux = planes_ref[b, base + 0]
            uy = planes_ref[b, base + 1]
            uz = planes_ref[b, base + 2]
            off = planes_ref[b, base + 3]
            u = e0 * ux + e1 * uy + e2 * uz                        # (8, 1)
            d = jnp.sum(u * pts_s, axis=0, keepdims=True) + off    # (1, N)
            refl = pts_s - 2.0 * (u * d)                           # (8, N)
            r2 = jnp.sum(refl * refl, axis=0, keepdims=True)       # (1, N)
            # column j of head c: [-2rx, -2ry, -2rz, 1, r2_j, 0, 0, 0]
            cols.append(scale_col * refl + e3 + e4 * r2)
        refl_aug = jnp.concatenate(cols, axis=1)                   # (8, C*N)

        # dist2[i, c*N + j] = p2_i + r2_{c,j} - 2 <x_i, refl_{c,j}>
        dist2 = jnp.dot(pts_lhs, refl_aug,
                        preferred_element_type=jnp.float32)        # (N, C*N)
        dist2 = jnp.maximum(dist2, 0.0)   # guard against f32 cancellation

        # Backward direction for ALL heads at once (columns are head-blocked).
        bwd_acc = bwd_acc + jnp.min(dist2, axis=0, keepdims=True)
        # Forward direction: per-head row mins over aligned 128-lane slices.
        for c in range(n_heads):
            fwd_acc = fwd_acc + jnp.min(dist2[:, c * n:(c + 1) * n],
                                        axis=1, keepdims=True)

    total = (jnp.sum(fwd_acc) + jnp.sum(bwd_acc)) * inv_bn
    out_ref[...] = jnp.full(out_ref.shape, total, jnp.float32)


@jax.jit
def chamfer_loss(predicted_planes, sample_points, voxel_grids=None,
                 cp_grids=None, *, reg_coef=25.0):
    """predicted_planes: (B, C, 4); sample_points: (B, N, 3).
    voxel_grids / cp_grids are accepted (as in the torch forward) but unused."""
    del voxel_grids, cp_grids  # unused by the reference forward pass
    B, C, _ = predicted_planes.shape
    _, N, D = sample_points.shape
    assert D == 3

    pts = sample_points.astype(jnp.float32)                        # (B, N, 3)
    planes = predicted_planes.astype(jnp.float32)                  # (B, C, 4)

    normals = planes[..., :3]
    unit = normals * lax.rsqrt(jnp.sum(normals * normals, axis=-1,
                                       keepdims=True))             # (B, C, 3)
    offsets = planes[..., 3:4]                                     # (B, C, 1)

    # Regularization term (unit-normal Gram Frobenius) hoisted out of the
    # kernel; O(B*C^2) and fused under jit.
    gram = jnp.einsum('bcd,bed->bce', unit, unit) - jnp.eye(C, dtype=jnp.float32)
    reg = jnp.sum(jnp.sqrt(jnp.sum(gram * gram, axis=(1, 2))))

    # MXU lhs: (B, N, 8) rows [x, y, z, p2, 1, 0, 0, 0]
    p2 = jnp.sum(pts * pts, axis=-1, keepdims=True)
    pts_lhs = jnp.concatenate(
        [pts, p2, jnp.ones_like(p2), jnp.zeros((B, N, 3), jnp.float32)],
        axis=-1)                                                   # (B, N, 8)

    # Lane-dense points: (B, 8, N), coords on sublanes, zero-padded.
    pts_s = jnp.concatenate(
        [jnp.swapaxes(pts, 1, 2), jnp.zeros((B, 5, N), jnp.float32)],
        axis=1)                                                    # (B, 8, N)

    # Flattened SMEM plane table: per head [ux, uy, uz, off]  -> (B, C*4).
    planes_smem = jnp.concatenate([unit, offsets], axis=-1).reshape(B, C * 4)

    kernel = functools.partial(_chamfer_kernel, n_batch=B, n_heads=C,
                               inv_bn=1.0 / (B * N))

    out = pl.pallas_call(
        kernel,
        out_shape=jax.ShapeDtypeStruct((1, _OUT_LANES), jnp.float32),
        in_specs=[
            pl.BlockSpec(memory_space=pltpu.MemorySpace.VMEM),   # (B, N, 8) MXU lhs
            pl.BlockSpec(memory_space=pltpu.MemorySpace.VMEM),   # (B, 8, N) lane-dense pts
            pl.BlockSpec(memory_space=pltpu.MemorySpace.SMEM),   # (B, C*4) unit planes
        ],
        out_specs=pl.BlockSpec(memory_space=pltpu.MemorySpace.VMEM),
    )(pts_lhs, pts_s, planes_smem)

    refl_loss = out[0, 0]
    return (refl_loss + reg_coef * reg).reshape(1)   # matches torch shape (1,)


def _reference(planes, points, reg_coef):
    """Pure-JAX reference mirroring the PyTorch module."""
    normals = planes[..., :3]
    nunit = normals / jnp.linalg.norm(normals, axis=-1, keepdims=True)
    gram = jnp.einsum('bcd,bed->bce', nunit, nunit) - jnp.eye(planes.shape[1])
    reg = jnp.sqrt(jnp.sum(gram ** 2, axis=(1, 2)))                 # (B,)
    refl_loss = 0.0
    for h in range(planes.shape[1]):
        n = nunit[:, h, :]
        off = planes[:, h, 3]
        d = jnp.einsum('bd,bnd->bn', n, points) + off[:, None]
        refl = points - 2.0 * d[..., None] * n[:, None, :]
        diff = points[:, :, None, :] - refl[:, None, :, :]
        dist2 = jnp.sum(diff ** 2, axis=-1)                         # (B, N, N)
        fwd = jnp.mean(jnp.min(dist2, axis=2), axis=1)
        bwd = jnp.mean(jnp.min(dist2, axis=1), axis=1)
        refl_loss = refl_loss + jnp.mean(fwd + bwd)
    return refl_loss + reg_coef * jnp.sum(reg)


if __name__ == "__main__":
    key = jax.random.PRNGKey(0)
    kp, ks = jax.random.split(key)
    B, C, N = 2, 3, 128
    predicted_planes = jax.random.normal(kp, (B, C, 4), jnp.float32)
    sample_points = jax.random.normal(ks, (B, N, 3), jnp.float32)
    # Accepted by the torch forward but never used there:
    voxel_grids = jnp.zeros((B, 1, 8, 8, 8), jnp.float32)
    cp_grids = jnp.zeros((B, 3, 8, 8, 8), jnp.float32)

    reg_coef = 25.0
    loss = chamfer_loss(predicted_planes, sample_points, voxel_grids, cp_grids,
                        reg_coef=reg_coef)
    loss = jax.block_until_ready(loss)

    ref = _reference(predicted_planes, sample_points, reg_coef)
    np.testing.assert_allclose(np.asarray(loss)[0], float(ref),
                               rtol=2e-3, atol=2e-3)
    print("KERNEL_OK")
</pallas_src>

<mosaic_0001>
module attributes {stable_mosaic.version = 11 : i64} {
  func.func @_chamfer_kernel(%arg0: memref<2x128x8xf32, #tpu.memory_space<vmem>>, %arg1: memref<2x8x128xf32, #tpu.memory_space<vmem>>, %arg2: memref<2x12xf32, #tpu.memory_space<smem>>, %arg3: memref<1x128xf32, #tpu.memory_space<vmem>>) attributes {dimension_semantics = [], scalar_prefetch = 0 : i64, scratch_operands = 0 : i64, tpu.core_type = #tpu.core_type<tc>} {
    %0 = tpu.iota {dimensions = array<i32: 0>} : vector<8x1xi32>
    %c0_i32 = arith.constant 0 : i32
    %1 = vector.broadcast %c0_i32 : i32 to vector<8x1xi32>
    %2 = arith.cmpi eq, %0, %1 : vector<8x1xi32>
    %3 = arith.extui %2 : vector<8x1xi1> to vector<8x1xi32>
    %4 = arith.sitofp %3 : vector<8x1xi32> to vector<8x1xf32>
    %c1_i32 = arith.constant 1 : i32
    %5 = vector.broadcast %c1_i32 : i32 to vector<8x1xi32>
    %6 = arith.cmpi eq, %0, %5 : vector<8x1xi32>
    %7 = arith.extui %6 : vector<8x1xi1> to vector<8x1xi32>
    %8 = arith.sitofp %7 : vector<8x1xi32> to vector<8x1xf32>
    %c2_i32 = arith.constant 2 : i32
    %9 = vector.broadcast %c2_i32 : i32 to vector<8x1xi32>
    %10 = arith.cmpi eq, %0, %9 : vector<8x1xi32>
    %11 = arith.extui %10 : vector<8x1xi1> to vector<8x1xi32>
    %12 = arith.sitofp %11 : vector<8x1xi32> to vector<8x1xf32>
    %c3_i32 = arith.constant 3 : i32
    %13 = vector.broadcast %c3_i32 : i32 to vector<8x1xi32>
    %14 = arith.cmpi eq, %0, %13 : vector<8x1xi32>
    %15 = arith.extui %14 : vector<8x1xi1> to vector<8x1xi32>
    %16 = arith.sitofp %15 : vector<8x1xi32> to vector<8x1xf32>
    %c4_i32 = arith.constant 4 : i32
    %17 = vector.broadcast %c4_i32 : i32 to vector<8x1xi32>
    %18 = arith.cmpi eq, %0, %17 : vector<8x1xi32>
    %19 = arith.extui %18 : vector<8x1xi1> to vector<8x1xi32>
    %20 = arith.sitofp %19 : vector<8x1xi32> to vector<8x1xf32>
    %c3_i32_0 = arith.constant 3 : i32
    %21 = vector.broadcast %c3_i32_0 : i32 to vector<8x1xi32>
    %22 = arith.cmpi slt, %0, %21 : vector<8x1xi32>
    %cst = arith.constant -2.000000e+00 : f32
    %cst_1 = arith.constant 0.000000e+00 : f32
    %23 = vector.broadcast %cst : f32 to vector<8x1xf32>
    %24 = vector.broadcast %cst_1 : f32 to vector<8x1xf32>
    %25 = arith.select %22, %23, %24 : vector<8x1xi1>, vector<8x1xf32>
    %cst_2 = arith.constant 0.000000e+00 : f32
    %26 = vector.broadcast %cst_2 : f32 to vector<128x1xf32>
    %cst_3 = arith.constant 0.000000e+00 : f32
    %27 = vector.broadcast %cst_3 : f32 to vector<1x384xf32>
    %c0 = arith.constant 0 : index
    %c0_4 = arith.constant 0 : index
    %c0_5 = arith.constant 0 : index
    %28 = vector.load %arg0[%c0, %c0_4, %c0_5] : memref<2x128x8xf32, #tpu.memory_space<vmem>>, vector<1x128x8xf32>
    %29 = vector.shape_cast %28 : vector<1x128x8xf32> to vector<128x8xf32>
    %c0_6 = arith.constant 0 : index
    %c0_7 = arith.constant 0 : index
    %c0_8 = arith.constant 0 : index
    %30 = vector.load %arg1[%c0_6, %c0_7, %c0_8] : memref<2x8x128xf32, #tpu.memory_space<vmem>>, vector<1x8x128xf32>
    %31 = vector.shape_cast %30 : vector<1x8x128xf32> to vector<8x128xf32>
    %c0_9 = arith.constant 0 : index
    %c0_10 = arith.constant 0 : index
    %32 = memref.load %arg2[%c0_9, %c0_10] : memref<2x12xf32, #tpu.memory_space<smem>>
    %c0_11 = arith.constant 0 : index
    %c1 = arith.constant 1 : index
    %33 = memref.load %arg2[%c0_11, %c1] : memref<2x12xf32, #tpu.memory_space<smem>>
    %c0_12 = arith.constant 0 : index
    %c2 = arith.constant 2 : index
    %34 = memref.load %arg2[%c0_12, %c2] : memref<2x12xf32, #tpu.memory_space<smem>>
    %c0_13 = arith.constant 0 : index
    %c3 = arith.constant 3 : index
    %35 = memref.load %arg2[%c0_13, %c3] : memref<2x12xf32, #tpu.memory_space<smem>>
    %36 = vector.broadcast %32 : f32 to vector<8x1xf32>
    %37 = arith.mulf %4, %36 : vector<8x1xf32>
    %38 = vector.broadcast %33 : f32 to vector<8x1xf32>
    %39 = arith.mulf %8, %38 : vector<8x1xf32>
    %40 = arith.addf %37, %39 : vector<8x1xf32>
    %41 = vector.broadcast %34 : f32 to vector<8x1xf32>
    %42 = arith.mulf %12, %41 : vector<8x1xf32>
    %43 = arith.addf %40, %42 : vector<8x1xf32>
    %44 = vector.broadcast %43 : vector<8x1xf32> to vector<8x128xf32>
    %45 = arith.mulf %44, %31 : vector<8x128xf32>
    %cst_14 = arith.constant dense<0.000000e+00> : vector<128xf32>
    %46 = vector.multi_reduction <add>, %45, %cst_14 [0] : vector<8x128xf32> to vector<128xf32>
    %47 = vector.shape_cast %46 : vector<128xf32> to vector<1x128xf32>
    %48 = vector.broadcast %35 : f32 to vector<1x128xf32>
    %49 = arith.addf %47, %48 : vector<1x128xf32>
    %50 = vector.broadcast %43 : vector<8x1xf32> to vector<8x128xf32>
    %51 = vector.broadcast %49 : vector<1x128xf32> to vector<8x128xf32>
    %52 = arith.mulf %50, %51 : vector<8x128xf32>
    %cst_15 = arith.constant 2.000000e+00 : f32
    %53 = vector.broadcast %cst_15 : f32 to vector<8x128xf32>
    %54 = arith.mulf %53, %52 : vector<8x128xf32>
    %55 = arith.subf %31, %54 : vector<8x128xf32>
    %56 = arith.mulf %55, %55 : vector<8x128xf32>
    %cst_16 = arith.constant dense<0.000000e+00> : vector<128xf32>
    %57 = vector.multi_reduction <add>, %56, %cst_16 [0] : vector<8x128xf32> to vector<128xf32>
    %58 = vector.shape_cast %57 : vector<128xf32> to vector<1x128xf32>
    %59 = vector.broadcast %25 : vector<8x1xf32> to vector<8x128xf32>
    %60 = arith.mulf %59, %55 : vector<8x128xf32>
    %61 = vector.broadcast %16 : vector<8x1xf32> to vector<8x128xf32>
    %62 = arith.addf %60, %61 : vector<8x128xf32>
    %63 = vector.broadcast %20 : vector<8x1xf32> to vector<8x128xf32>
    %64 = vector.broadcast %58 : vector<1x128xf32> to vector<8x128xf32>
    %65 = arith.mulf %63, %64 : vector<8x128xf32>
    %66 = arith.addf %62, %65 : vector<8x128xf32>
    %c0_17 = arith.constant 0 : index
    %c4 = arith.constant 4 : index
    %67 = memref.load %arg2[%c0_17, %c4] : memref<2x12xf32, #tpu.memory_space<smem>>
    %c0_18 = arith.constant 0 : index
    %c5 = arith.constant 5 : index
    %68 = memref.load %arg2[%c0_18, %c5] : memref<2x12xf32, #tpu.memory_space<smem>>
    %c0_19 = arith.constant 0 : index
    %c6 = arith.constant 6 : index
    %69 = memref.load %arg2[%c0_19, %c6] : memref<2x12xf32, #tpu.memory_space<smem>>
    %c0_20 = arith.constant 0 : index
    %c7 = arith.constant 7 : index
    %70 = memref.load %arg2[%c0_20, %c7] : memref<2x12xf32, #tpu.memory_space<smem>>
    %71 = vector.broadcast %67 : f32 to vector<8x1xf32>
    %72 = arith.mulf %4, %71 : vector<8x1xf32>
    %73 = vector.broadcast %68 : f32 to vector<8x1xf32>
    %74 = arith.mulf %8, %73 : vector<8x1xf32>
    %75 = arith.addf %72, %74 : vector<8x1xf32>
    %76 = vector.broadcast %69 : f32 to vector<8x1xf32>
    %77 = arith.mulf %12, %76 : vector<8x1xf32>
    %78 = arith.addf %75, %77 : vector<8x1xf32>
    %79 = vector.broadcast %78 : vector<8x1xf32> to vector<8x128xf32>
    %80 = arith.mulf %79, %31 : vector<8x128xf32>
    %cst_21 = arith.constant dense<0.000000e+00> : vector<128xf32>
    %81 = vector.multi_reduction <add>, %80, %cst_21 [0] : vector<8x128xf32> to vector<128xf32>
    %82 = vector.shape_cast %81 : vector<128xf32> to vector<1x128xf32>
    %83 = vector.broadcast %70 : f32 to vector<1x128xf32>
    %84 = arith.addf %82, %83 : vector<1x128xf32>
    %85 = vector.broadcast %78 : vector<8x1xf32> to vector<8x128xf32>
    %86 = vector.broadcast %84 : vector<1x128xf32> to vector<8x128xf32>
    %87 = arith.mulf %85, %86 : vector<8x128xf32>
    %cst_22 = arith.constant 2.000000e+00 : f32
    %88 = vector.broadcast %cst_22 : f32 to vector<8x128xf32>
    %89 = arith.mulf %88, %87 : vector<8x128xf32>
    %90 = arith.subf %31, %89 : vector<8x128xf32>
    %91 = arith.mulf %90, %90 : vector<8x128xf32>
    %cst_23 = arith.constant dense<0.000000e+00> : vector<128xf32>
    %92 = vector.multi_reduction <add>, %91, %cst_23 [0] : vector<8x128xf32> to vector<128xf32>
    %93 = vector.shape_cast %92 : vector<128xf32> to vector<1x128xf32>
    %94 = vector.broadcast %25 : vector<8x1xf32> to vector<8x128xf32>
    %95 = arith.mulf %94, %90 : vector<8x128xf32>
    %96 = vector.broadcast %16 : vector<8x1xf32> to vector<8x128xf32>
    %97 = arith.addf %95, %96 : vector<8x128xf32>
    %98 = vector.broadcast %20 : vector<8x1xf32> to vector<8x128xf32>
    %99 = vector.broadcast %93 : vector<1x128xf32> to vector<8x128xf32>
    %100 = arith.mulf %98, %99 : vector<8x128xf32>
    %101 = arith.addf %97, %100 : vector<8x128xf32>
    %c0_24 = arith.constant 0 : index
    %c8 = arith.constant 8 : index
    %102 = memref.load %arg2[%c0_24, %c8] : memref<2x12xf32, #tpu.memory_space<smem>>
    %c0_25 = arith.constant 0 : index
    %c9 = arith.constant 9 : index
    %103 = memref.load %arg2[%c0_25, %c9] : memref<2x12xf32, #tpu.memory_space<smem>>
    %c0_26 = arith.constant 0 : index
    %c10 = arith.constant 10 : index
    %104 = memref.load %arg2[%c0_26, %c10] : memref<2x12xf32, #tpu.memory_space<smem>>
    %c0_27 = arith.constant 0 : index
    %c11 = arith.constant 11 : index
    %105 = memref.load %arg2[%c0_27, %c11] : memref<2x12xf32, #tpu.memory_space<smem>>
    %106 = vector.broadcast %102 : f32 to vector<8x1xf32>
    %107 = arith.mulf %4, %106 : vector<8x1xf32>
    %108 = vector.broadcast %103 : f32 to vector<8x1xf32>
    %109 = arith.mulf %8, %108 : vector<8x1xf32>
    %110 = arith.addf %107, %109 : vector<8x1xf32>
    %111 = vector.broadcast %104 : f32 to vector<8x1xf32>
    %112 = arith.mulf %12, %111 : vector<8x1xf32>
    %113 = arith.addf %110, %112 : vector<8x1xf32>
    %114 = vector.broadcast %113 : vector<8x1xf32> to vector<8x128xf32>
    %115 = arith.mulf %114, %31 : vector<8x128xf32>
    %cst_28 = arith.constant dense<0.000000e+00> : vector<128xf32>
    %116 = vector.multi_reduction <add>, %115, %cst_28 [0] : vector<8x128xf32> to vector<128xf32>
    %117 = vector.shape_cast %116 : vector<128xf32> to vector<1x128xf32>
    %118 = vector.broadcast %105 : f32 to vector<1x128xf32>
    %119 = arith.addf %117, %118 : vector<1x128xf32>
    %120 = vector.broadcast %113 : vector<8x1xf32> to vector<8x128xf32>
    %121 = vector.broadcast %119 : vector<1x128xf32> to vector<8x128xf32>
    %122 = arith.mulf %120, %121 : vector<8x128xf32>
    %cst_29 = arith.constant 2.000000e+00 : f32
    %123 = vector.broadcast %cst_29 : f32 to vector<8x128xf32>
    %124 = arith.mulf %123, %122 : vector<8x128xf32>
    %125 = arith.subf %31, %124 : vector<8x128xf32>
    %126 = arith.mulf %125, %125 : vector<8x128xf32>
    %cst_30 = arith.constant dense<0.000000e+00> : vector<128xf32>
    %127 = vector.multi_reduction <add>, %126, %cst_30 [0] : vector<8x128xf32> to vector<128xf32>
    %128 = vector.shape_cast %127 : vector<128xf32> to vector<1x128xf32>
    %129 = vector.broadcast %25 : vector<8x1xf32> to vector<8x128xf32>
    %130 = arith.mulf %129, %125 : vector<8x128xf32>
    %131 = vector.broadcast %16 : vector<8x1xf32> to vector<8x128xf32>
    %132 = arith.addf %130, %131 : vector<8x128xf32>
    %133 = vector.broadcast %20 : vector<8x1xf32> to vector<8x128xf32>
    %134 = vector.broadcast %128 : vector<1x128xf32> to vector<8x128xf32>
    %135 = arith.mulf %133, %134 : vector<8x128xf32>
    %136 = arith.addf %132, %135 : vector<8x128xf32>
    %137 = tpu.concatenate %66, %101, %136 in 1 : vector<8x128xf32>, vector<8x128xf32>, vector<8x128xf32> -> vector<8x384xf32>
    %cst_31 = arith.constant dense<0.000000e+00> : vector<128x384xf32>
    %138 = tpu.matmul %29, %137, %cst_31 {dimension_numbers = #tpu.dot_dimension_numbers<[1], [0], [0], [1], [0, 0, 1, 1], [], []>} : vector<128x8xf32>, vector<8x384xf32>, vector<128x384xf32> -> vector<128x384xf32>
    %cst_32 = arith.constant 0.000000e+00 : f32
    %139 = vector.broadcast %cst_32 : f32 to vector<128x384xf32>
    %140 = arith.maximumf %138, %139 : vector<128x384xf32>
    %cst_33 = arith.constant dense<0x7F800000> : vector<384xf32>
    %141 = vector.multi_reduction <minimumf>, %140, %cst_33 [0] : vector<128x384xf32> to vector<384xf32>
    %142 = vector.shape_cast %141 : vector<384xf32> to vector<1x384xf32>
    %143 = arith.addf %27, %142 : vector<1x384xf32>
    %144 = vector.extract_strided_slice %140 {offsets = [0, 0], sizes = [128, 128], strides = [1, 1]} : vector<128x384xf32> to vector<128x128xf32>
    %cst_34 = arith.constant dense<0x7F800000> : vector<128xf32>
    %145 = vector.multi_reduction <minimumf>, %144, %cst_34 [1] : vector<128x128xf32> to vector<128xf32>
    %146 = vector.shape_cast %145 : vector<128xf32> to vector<128x1xf32>
    %147 = arith.addf %26, %146 : vector<128x1xf32>
    %148 = vector.extract_strided_slice %140 {offsets = [0, 128], sizes = [128, 128], strides = [1, 1]} : vector<128x384xf32> to vector<128x128xf32>
    %cst_35 = arith.constant dense<0x7F800000> : vector<128xf32>
    %149 = vector.multi_reduction <minimumf>, %148, %cst_35 [1] : vector<128x128xf32> to vector<128xf32>
    %150 = vector.shape_cast %149 : vector<128xf32> to vector<128x1xf32>
    %151 = arith.addf %147, %150 : vector<128x1xf32>
    %152 = vector.extract_strided_slice %140 {offsets = [0, 256], sizes = [128, 128], strides = [1, 1]} : vector<128x384xf32> to vector<128x128xf32>
    %cst_36 = arith.constant dense<0x7F800000> : vector<128xf32>
    %153 = vector.multi_reduction <minimumf>, %152, %cst_36 [1] : vector<128x128xf32> to vector<128xf32>
    %154 = vector.shape_cast %153 : vector<128xf32> to vector<128x1xf32>
    %155 = arith.addf %151, %154 : vector<128x1xf32>
    %c1_37 = arith.constant 1 : index
    %c0_38 = arith.constant 0 : index
    %c0_39 = arith.constant 0 : index
    %156 = vector.load %arg0[%c1_37, %c0_38, %c0_39] : memref<2x128x8xf32, #tpu.memory_space<vmem>>, vector<1x128x8xf32>
    %157 = vector.shape_cast %156 : vector<1x128x8xf32> to vector<128x8xf32>
    %c1_40 = arith.constant 1 : index
    %c0_41 = arith.constant 0 : index
    %c0_42 = arith.constant 0 : index
    %158 = vector.load %arg1[%c1_40, %c0_41, %c0_42] : memref<2x8x128xf32, #tpu.memory_space<vmem>>, vector<1x8x128xf32>
    %159 = vector.shape_cast %158 : vector<1x8x128xf32> to vector<8x128xf32>
    %c1_43 = arith.constant 1 : index
    %c0_44 = arith.constant 0 : index
    %160 = memref.load %arg2[%c1_43, %c0_44] : memref<2x12xf32, #tpu.memory_space<smem>>
    %c1_45 = arith.constant 1 : index
    %c1_46 = arith.constant 1 : index
    %161 = memref.load %arg2[%c1_45, %c1_46] : memref<2x12xf32, #tpu.memory_space<smem>>
    %c1_47 = arith.constant 1 : index
    %c2_48 = arith.constant 2 : index
    %162 = memref.load %arg2[%c1_47, %c2_48] : memref<2x12xf32, #tpu.memory_space<smem>>
    %c1_49 = arith.constant 1 : index
    %c3_50 = arith.constant 3 : index
    %163 = memref.load %arg2[%c1_49, %c3_50] : memref<2x12xf32, #tpu.memory_space<smem>>
    %164 = vector.broadcast %160 : f32 to vector<8x1xf32>
    %165 = arith.mulf %4, %164 : vector<8x1xf32>
    %166 = vector.broadcast %161 : f32 to vector<8x1xf32>
    %167 = arith.mulf %8, %166 : vector<8x1xf32>
    %168 = arith.addf %165, %167 : vector<8x1xf32>
    %169 = vector.broadcast %162 : f32 to vector<8x1xf32>
    %170 = arith.mulf %12, %169 : vector<8x1xf32>
    %171 = arith.addf %168, %170 : vector<8x1xf32>
    %172 = vector.broadcast %171 : vector<8x1xf32> to vector<8x128xf32>
    %173 = arith.mulf %172, %159 : vector<8x128xf32>
    %cst_51 = arith.constant dense<0.000000e+00> : vector<128xf32>
    %174 = vector.multi_reduction <add>, %173, %cst_51 [0] : vector<8x128xf32> to vector<128xf32>
    %175 = vector.shape_cast %174 : vector<128xf32> to vector<1x128xf32>
    %176 = vector.broadcast %163 : f32 to vector<1x128xf32>
    %177 = arith.addf %175, %176 : vector<1x128xf32>
    %178 = vector.broadcast %171 : vector<8x1xf32> to vector<8x128xf32>
    %179 = vector.broadcast %177 : vector<1x128xf32> to vector<8x128xf32>
    %180 = arith.mulf %178, %179 : vector<8x128xf32>
    %cst_52 = arith.constant 2.000000e+00 : f32
    %181 = vector.broadcast %cst_52 : f32 to vector<8x128xf32>
    %182 = arith.mulf %181, %180 : vector<8x128xf32>
    %183 = arith.subf %159, %182 : vector<8x128xf32>
    %184 = arith.mulf %183, %183 : vector<8x128xf32>
    %cst_53 = arith.constant dense<0.000000e+00> : vector<128xf32>
    %185 = vector.multi_reduction <add>, %184, %cst_53 [0] : vector<8x128xf32> to vector<128xf32>
    %186 = vector.shape_cast %185 : vector<128xf32> to vector<1x128xf32>
    %187 = vector.broadcast %25 : vector<8x1xf32> to vector<8x128xf32>
    %188 = arith.mulf %187, %183 : vector<8x128xf32>
    %189 = vector.broadcast %16 : vector<8x1xf32> to vector<8x128xf32>
    %190 = arith.addf %188, %189 : vector<8x128xf32>
    %191 = vector.broadcast %20 : vector<8x1xf32> to vector<8x128xf32>
    %192 = vector.broadcast %186 : vector<1x128xf32> to vector<8x128xf32>
    %193 = arith.mulf %191, %192 : vector<8x128xf32>
    %194 = arith.addf %190, %193 : vector<8x128xf32>
    %c1_54 = arith.constant 1 : index
    %c4_55 = arith.constant 4 : index
    %195 = memref.load %arg2[%c1_54, %c4_55] : memref<2x12xf32, #tpu.memory_space<smem>>
    %c1_56 = arith.constant 1 : index
    %c5_57 = arith.constant 5 : index
    %196 = memref.load %arg2[%c1_56, %c5_57] : memref<2x12xf32, #tpu.memory_space<smem>>
    %c1_58 = arith.constant 1 : index
    %c6_59 = arith.constant 6 : index
    %197 = memref.load %arg2[%c1_58, %c6_59] : memref<2x12xf32, #tpu.memory_space<smem>>
    %c1_60 = arith.constant 1 : index
    %c7_61 = arith.constant 7 : index
    %198 = memref.load %arg2[%c1_60, %c7_61] : memref<2x12xf32, #tpu.memory_space<smem>>
    %199 = vector.broadcast %195 : f32 to vector<8x1xf32>
    %200 = arith.mulf %4, %199 : vector<8x1xf32>
    %201 = vector.broadcast %196 : f32 to vector<8x1xf32>
    %202 = arith.mulf %8, %201 : vector<8x1xf32>
    %203 = arith.addf %200, %202 : vector<8x1xf32>
    %204 = vector.broadcast %197 : f32 to vector<8x1xf32>
    %205 = arith.mulf %12, %204 : vector<8x1xf32>
    %206 = arith.addf %203, %205 : vector<8x1xf32>
    %207 = vector.broadcast %206 : vector<8x1xf32> to vector<8x128xf32>
    %208 = arith.mulf %207, %159 : vector<8x128xf32>
    %cst_62 = arith.constant dense<0.000000e+00> : vector<128xf32>
    %209 = vector.multi_reduction <add>, %208, %cst_62 [0] : vector<8x128xf32> to vector<128xf32>
    %210 = vector.shape_cast %209 : vector<128xf32> to vector<1x128xf32>
    %211 = vector.broadcast %198 : f32 to vector<1x128xf32>
    %212 = arith.addf %210, %211 : vector<1x128xf32>
    %213 = vector.broadcast %206 : vector<8x1xf32> to vector<8x128xf32>
    %214 = vector.broadcast %212 : vector<1x128xf32> to vector<8x128xf32>
    %215 = arith.mulf %213, %214 : vector<8x128xf32>
    %cst_63 = arith.constant 2.000000e+00 : f32
    %216 = vector.broadcast %cst_63 : f32 to vector<8x128xf32>
    %217 = arith.mulf %216, %215 : vector<8x128xf32>
    %218 = arith.subf %159, %217 : vector<8x128xf32>
    %219 = arith.mulf %218, %218 : vector<8x128xf32>
    %cst_64 = arith.constant dense<0.000000e+00> : vector<128xf32>
    %220 = vector.multi_reduction <add>, %219, %cst_64 [0] : vector<8x128xf32> to vector<128xf32>
    %221 = vector.shape_cast %220 : vector<128xf32> to vector<1x128xf32>
    %222 = vector.broadcast %25 : vector<8x1xf32> to vector<8x128xf32>
    %223 = arith.mulf %222, %218 : vector<8x128xf32>
    %224 = vector.broadcast %16 : vector<8x1xf32> to vector<8x128xf32>
    %225 = arith.addf %223, %224 : vector<8x128xf32>
    %226 = vector.broadcast %20 : vector<8x1xf32> to vector<8x128xf32>
    %227 = vector.broadcast %221 : vector<1x128xf32> to vector<8x128xf32>
    %228 = arith.mulf %226, %227 : vector<8x128xf32>
    %229 = arith.addf %225, %228 : vector<8x128xf32>
    %c1_65 = arith.constant 1 : index
    %c8_66 = arith.constant 8 : index
    %230 = memref.load %arg2[%c1_65, %c8_66] : memref<2x12xf32, #tpu.memory_space<smem>>
    %c1_67 = arith.constant 1 : index
    %c9_68 = arith.constant 9 : index
    %231 = memref.load %arg2[%c1_67, %c9_68] : memref<2x12xf32, #tpu.memory_space<smem>>
    %c1_69 = arith.constant 1 : index
    %c10_70 = arith.constant 10 : index
    %232 = memref.load %arg2[%c1_69, %c10_70] : memref<2x12xf32, #tpu.memory_space<smem>>
    %c1_71 = arith.constant 1 : index
    %c11_72 = arith.constant 11 : index
    %233 = memref.load %arg2[%c1_71, %c11_72] : memref<2x12xf32, #tpu.memory_space<smem>>
    %234 = vector.broadcast %230 : f32 to vector<8x1xf32>
    %235 = arith.mulf %4, %234 : vector<8x1xf32>
    %236 = vector.broadcast %231 : f32 to vector<8x1xf32>
    %237 = arith.mulf %8, %236 : vector<8x1xf32>
    %238 = arith.addf %235, %237 : vector<8x1xf32>
    %239 = vector.broadcast %232 : f32 to vector<8x1xf32>
    %240 = arith.mulf %12, %239 : vector<8x1xf32>
    %241 = arith.addf %238, %240 : vector<8x1xf32>
    %242 = vector.broadcast %241 : vector<8x1xf32> to vector<8x128xf32>
    %243 = arith.mulf %242, %159 : vector<8x128xf32>
    %cst_73 = arith.constant dense<0.000000e+00> : vector<128xf32>
    %244 = vector.multi_reduction <add>, %243, %cst_73 [0] : vector<8x128xf32> to vector<128xf32>
    %245 = vector.shape_cast %244 : vector<128xf32> to vector<1x128xf32>
    %246 = vector.broadcast %233 : f32 to vector<1x128xf32>
    %247 = arith.addf %245, %246 : vector<1x128xf32>
    %248 = vector.broadcast %241 : vector<8x1xf32> to vector<8x128xf32>
    %249 = vector.broadcast %247 : vector<1x128xf32> to vector<8x128xf32>
    %250 = arith.mulf %248, %249 : vector<8x128xf32>
    %cst_74 = arith.constant 2.000000e+00 : f32
    %251 = vector.broadcast %cst_74 : f32 to vector<8x128xf32>
    %252 = arith.mulf %251, %250 : vector<8x128xf32>
    %253 = arith.subf %159, %252 : vector<8x128xf32>
    %254 = arith.mulf %253, %253 : vector<8x128xf32>
    %cst_75 = arith.constant dense<0.000000e+00> : vector<128xf32>
    %255 = vector.multi_reduction <add>, %254, %cst_75 [0] : vector<8x128xf32> to vector<128xf32>
    %256 = vector.shape_cast %255 : vector<128xf32> to vector<1x128xf32>
    %257 = vector.broadcast %25 : vector<8x1xf32> to vector<8x128xf32>
    %258 = arith.mulf %257, %253 : vector<8x128xf32>
    %259 = vector.broadcast %16 : vector<8x1xf32> to vector<8x128xf32>
    %260 = arith.addf %258, %259 : vector<8x128xf32>
    %261 = vector.broadcast %20 : vector<8x1xf32> to vector<8x128xf32>
    %262 = vector.broadcast %256 : vector<1x128xf32> to vector<8x128xf32>
    %263 = arith.mulf %261, %262 : vector<8x128xf32>
    %264 = arith.addf %260, %263 : vector<8x128xf32>
    %265 = tpu.concatenate %194, %229, %264 in 1 : vector<8x128xf32>, vector<8x128xf32>, vector<8x128xf32> -> vector<8x384xf32>
    %cst_76 = arith.constant dense<0.000000e+00> : vector<128x384xf32>
    %266 = tpu.matmul %157, %265, %cst_76 {dimension_numbers = #tpu.dot_dimension_numbers<[1], [0], [0], [1], [0, 0, 1, 1], [], []>} : vector<128x8xf32>, vector<8x384xf32>, vector<128x384xf32> -> vector<128x384xf32>
    %cst_77 = arith.constant 0.000000e+00 : f32
    %267 = vector.broadcast %cst_77 : f32 to vector<128x384xf32>
    %268 = arith.maximumf %266, %267 : vector<128x384xf32>
    %cst_78 = arith.constant dense<0x7F800000> : vector<384xf32>
    %269 = vector.multi_reduction <minimumf>, %268, %cst_78 [0] : vector<128x384xf32> to vector<384xf32>
    %270 = vector.shape_cast %269 : vector<384xf32> to vector<1x384xf32>
    %271 = arith.addf %143, %270 : vector<1x384xf32>
    %272 = vector.extract_strided_slice %268 {offsets = [0, 0], sizes = [128, 128], strides = [1, 1]} : vector<128x384xf32> to vector<128x128xf32>
    %cst_79 = arith.constant dense<0x7F800000> : vector<128xf32>
    %273 = vector.multi_reduction <minimumf>, %272, %cst_79 [1] : vector<128x128xf32> to vector<128xf32>
    %274 = vector.shape_cast %273 : vector<128xf32> to vector<128x1xf32>
    %275 = arith.addf %155, %274 : vector<128x1xf32>
    %276 = vector.extract_strided_slice %268 {offsets = [0, 128], sizes = [128, 128], strides = [1, 1]} : vector<128x384xf32> to vector<128x128xf32>
    %cst_80 = arith.constant dense<0x7F800000> : vector<128xf32>
    %277 = vector.multi_reduction <minimumf>, %276, %cst_80 [1] : vector<128x128xf32> to vector<128xf32>
    %278 = vector.shape_cast %277 : vector<128xf32> to vector<128x1xf32>
    %279 = arith.addf %275, %278 : vector<128x1xf32>
    %280 = vector.extract_strided_slice %268 {offsets = [0, 256], sizes = [128, 128], strides = [1, 1]} : vector<128x384xf32> to vector<128x128xf32>
    %cst_81 = arith.constant dense<0x7F800000> : vector<128xf32>
    %281 = vector.multi_reduction <minimumf>, %280, %cst_81 [1] : vector<128x128xf32> to vector<128xf32>
    %282 = vector.shape_cast %281 : vector<128xf32> to vector<128x1xf32>
    %283 = arith.addf %279, %282 : vector<128x1xf32>
    %284 = vector.shape_cast %283 : vector<128x1xf32> to vector<1x128x1xf32>
    %cst_82 = arith.constant dense<0.000000e+00> : vector<1xf32>
    %285 = vector.multi_reduction <add>, %284, %cst_82 [1, 2] : vector<1x128x1xf32> to vector<1xf32>
    %286 = vector.shape_cast %285 : vector<1xf32> to vector<1x1x1xf32>
    %287 = vector.extract %286[0, 0, 0] : f32 from vector<1x1x1xf32>
    %288 = vector.shape_cast %271 : vector<1x384xf32> to vector<1x1x384xf32>
    %cst_83 = arith.constant dense<0.000000e+00> : vector<1xf32>
    %289 = vector.multi_reduction <add>, %288, %cst_83 [1, 2] : vector<1x1x384xf32> to vector<1xf32>
    %290 = vector.shape_cast %289 : vector<1xf32> to vector<1x1x1xf32>
    %291 = vector.extract %290[0, 0, 0] : f32 from vector<1x1x1xf32>
    %292 = arith.addf %287, %291 : f32
    %cst_84 = arith.constant 3.906250e-03 : f32
    %293 = arith.mulf %292, %cst_84 : f32
    %294 = vector.broadcast %293 : f32 to vector<1x128xf32>
    %c0_85 = arith.constant 0 : index
    %c0_86 = arith.constant 0 : index
    %295 = vector.load %arg3[%c0_85, %c0_86] : memref<1x128xf32, #tpu.memory_space<vmem>>, vector<1x128xf32>
    tpu.vector_store %arg3[%c0_85, %c0_86], %294 {strides = array<i32>} : memref<1x128xf32, #tpu.memory_space<vmem>>, vector<1x128xf32>,
    return
  }
}

</mosaic_0001>

<llo_original>
// kernel: chamfer_loss.1
$region0: #{chamfer_loss.1}
  #allocation0 [shape = 'u32[]', space=smem, size = 0x4, offset = 0x4, fixed_abs, tag = 'smem constant byte address 0x4 - core index']
  #allocation1 [shape = 'u32[144,128]{1,0:T(1,128)}', space=vmem, size = 0x12000, scoped, tag = 'internal scratch']
  %s0 = inlined_call_operand.vmem [shape: f32[2,128,8], index: 0, kind: input, shape index: {}]
  %s1 = inlined_call_operand.vmem [shape: f32[2,8,128], index: 1, kind: input, shape index: {}]
  %s2 = inlined_call_operand.vmem [shape: f32[2,12], index: 2, kind: input, shape index: {}]
  %s3 = inlined_call_operand.vmem [shape: f32[1,128], index: 3, kind: output, shape index: {}]
  %s4 = sld [smem:[#allocation0]]
  $region26: #{chamfer_loss.1} parent=0
    _
  %s6 = ssub.s32 1, %s4
  %s7 = scalar_select 0, %s6, %s4
  $region1: #{chamfer_loss.1} parent=0
    #allocation2 [shape = 'u8[1024]{0}', space=smem, size = 0x400, scoped, tag = 'input window, operand 2, single buffered']
    #allocation3 [shape = 's32[1]{0}', space=sflag, size = 0x4, scoped, tag = 'scoped memory for chamfer_loss.1']
    %8 = vsyncpa [#allocation3], 0
    // Predicated region
    $region2: #{chamfer_loss.1} parent=1 // pred_check
      _
    $region3: #{chamfer_loss.1} parent=1 // pred_check_branch
      %10 = sbr.rel (0) target = $region5
    $region4: #{chamfer_loss.1} parent=1 // pred_region
      _
    $region5: #{chamfer_loss.1} parent=1 // pred_fallthru
      _
    // Predicated region
    $region6: #{chamfer_loss.1} parent=1 // pred_check
      _
    $region7: #{chamfer_loss.1} parent=1 // pred_check_branch
      %12 = sbr.rel (0) target = $region9
    $region8: #{chamfer_loss.1} parent=1 // pred_region
      _
    $region9: #{chamfer_loss.1} parent=1 // pred_fallthru
      _
    // Predicated region
    $region10: #{chamfer_loss.1} parent=1 // pred_check
      _
    $region11: #{chamfer_loss.1} parent=1 // pred_check_branch
      %14 = sbr.rel (0) target = $region13
    $region12: #{chamfer_loss.1} parent=1 // pred_region
      %s16 = ssub.s32 32, 32
      %17 = vsyncadd [#allocation3], %s16
      %s19 = sshll.u32 %s2, 4
      %s20 = int_to_ptr.vmem [resolvable:$true] %s19
      %22 = dma.vmem_to_smem %s20, 32, [#allocation2], [#allocation3]
    $region13: #{chamfer_loss.1} parent=1 // pred_fallthru
      _
    // Predicated region
    $region14: #{chamfer_loss.1} parent=1 // pred_check
      _
    $region15: #{chamfer_loss.1} parent=1 // pred_check_branch
      %24 = sbr.rel (0) target = $region17
    $region16: #{chamfer_loss.1} parent=1 // pred_region
      %25 = dma.done [#allocation3], 32
    $region17: #{chamfer_loss.1} parent=1 // pred_fallthru
      _
    %26 = sfence
    %v27 = vlaneseq
    %v28 = vshrl.u32 %v27, 7
    %vm29 = vcmp.eq.s32.totalorder %v28, 0
    %v30 = vsel %vm29, 1, 0
    %v31 = vcvt.s32.f32 %v30
    %vm32 = vcmp.eq.s32.totalorder %v28, 1
    %v33 = vsel %vm32, 1, 0
    %v34 = vcvt.s32.f32 %v33
    %vm35 = vcmp.eq.s32.totalorder %v28, 2
    %v36 = vsel %vm35, 1, 0
    %v37 = vcvt.s32.f32 %v36
    %vm38 = vcmp.eq.s32.totalorder %v28, 3
    %v39 = vsel %vm38, 1, 0
    %v40 = vcvt.s32.f32 %v39
    %vm41 = vcmp.eq.s32.totalorder %v28, 4
    %v42 = vsel %vm41, 1, 0
    %v43 = vcvt.s32.f32 %v42
    %vm44 = vcmp.lt.s32.totalorder %v28, 3
    %v45 = vsel %vm44, -2.0, 0.0
    %v46 = vld [vmem:[%s0] sm:$0xff]
    %v47 = vld [vmem:[%s0 + $0x8] sm:$0xff]
    %v48 = vld [vmem:[%s0 + $0x10] sm:$0xff]
    %v49 = vld [vmem:[%s0 + $0x18] sm:$0xff]
    %v50 = vld [vmem:[%s0 + $0x20] sm:$0xff]
    %v51 = vld [vmem:[%s0 + $0x28] sm:$0xff]
    %v52 = vld [vmem:[%s0 + $0x30] sm:$0xff]
    %v53 = vld [vmem:[%s0 + $0x38] sm:$0xff]
    %v54 = vld [vmem:[%s0 + $0x40] sm:$0xff]
    %v55 = vld [vmem:[%s0 + $0x48] sm:$0xff]
    %v56 = vld [vmem:[%s0 + $0x50] sm:$0xff]
    %v57 = vld [vmem:[%s0 + $0x58] sm:$0xff]
    %v58 = vld [vmem:[%s0 + $0x60] sm:$0xff]
    %v59 = vld [vmem:[%s0 + $0x68] sm:$0xff]
    %v60 = vld [vmem:[%s0 + $0x70] sm:$0xff]
    %v61 = vld [vmem:[%s0 + $0x78] sm:$0xff]
    %v62 = vld [vmem:[%s1] sm:$0xff]
    %s63 = sld [smem:[#allocation2]]
    %s64 = sld [smem:[#allocation2 + $0x1]]
    %s65 = sld [smem:[#allocation2 + $0x2]]
    %s66 = sld [smem:[#allocation2 + $0x3]]
    %v67 = vstv %s63
    %v68 = vmul.f32 %v31, %v67
    %v69 = vstv %s64
    %v70 = vmul.f32 %v34, %v69
    %v71 = vadd.f32 %v68, %v70
    %v72 = vstv %s65
    %v73 = vmul.f32 %v37, %v72
    %v74 = vadd.f32 %v71, %v73
    %v75 = vmul.f32 %v74, %v62
    %v76 = vrot.slane %v75, 4
    %v77 = vadd.f32 %v75, %v76
    %v78 = vrot.slane %v77, 2
    %v79 = vadd.f32 %v77, %v78
    %v80 = vrot.slane %v79, 1
    %v81 = vadd.f32 %v79, %v80
    %v82 = vstv %s66
    %v83 = vadd.f32 %v81, %v82
    %v84 = vmul.f32 %v74, %v83
    %v85 = vmul.f32 %v84, 2.0
    %v86 = vsub.f32 %v62, %v85
    %v87 = vmul.f32 %v86, %v86
    %v88 = vrot.slane %v87, 4
    %v89 = vadd.f32 %v87, %v88
    %v90 = vrot.slane %v89, 2
    %v91 = vadd.f32 %v89, %v90
    %v92 = vrot.slane %v91, 1
    %v93 = vadd.f32 %v91, %v92
    %v94 = vmul.f32 %v45, %v86
    %v95 = vadd.f32 %v94, %v40
    %v96 = vmul.f32 %v43, %v93
    %v97 = vadd.f32 %v95, %v96
    %s98 = sld [smem:[#allocation2 + $0x4]]
    %s99 = sld [smem:[#allocation2 + $0x5]]
    %s100 = sld [smem:[#allocation2 + $0x6]]
    %s101 = sld [smem:[#allocation2 + $0x7]]
    %v102 = vstv %s98
    %v103 = vmul.f32 %v31, %v102
    %v104 = vstv %s99
    %v105 = vmul.f32 %v34, %v104
    %v106 = vadd.f32 %v103, %v105
    %v107 = vstv %s100
    %v108 = vmul.f32 %v37, %v107
    %v109 = vadd.f32 %v106, %v108
    %v110 = vmul.f32 %v109, %v62
    %v111 = vrot.slane %v110, 4
    %v112 = vadd.f32 %v110, %v111
    %v113 = vrot.slane %v112, 2
    %v114 = vadd.f32 %v112, %v113
    %v115 = vrot.slane %v114, 1
    %v116 = vadd.f32 %v114, %v115
    %v117 = vstv %s101
    %v118 = vadd.f32 %v116, %v117
    %v119 = vmul.f32 %v109, %v118
    %v120 = vmul.f32 %v119, 2.0
    %v121 = vsub.f32 %v62, %v120
    %v122 = vmul.f32 %v121, %v121
    %v123 = vrot.slane %v122, 4
    %v124 = vadd.f32 %v122, %v123
    %v125 = vrot.slane %v124, 2
    %v126 = vadd.f32 %v124, %v125
    %v127 = vrot.slane %v126, 1
    %v128 = vadd.f32 %v126, %v127
    %v129 = vmul.f32 %v45, %v121
    %v130 = vadd.f32 %v129, %v40
    %v131 = vmul.f32 %v43, %v128
    %v132 = vadd.f32 %v130, %v131
    %s133 = sld [smem:[#allocation2 + $0x8]]
    %s134 = sld [smem:[#allocation2 + $0x9]]
    %s135 = sld [smem:[#allocation2 + $0xa]]
    %s136 = sld [smem:[#allocation2 + $0xb]]
    %v137 = vstv %s133
    %v138 = vmul.f32 %v31, %v137
    %v139 = vstv %s134
    %v140 = vmul.f32 %v34, %v139
    %v141 = vadd.f32 %v138, %v140
    %v142 = vstv %s135
    %v143 = vmul.f32 %v37, %v142
    %v144 = vadd.f32 %v141, %v143
    %v145 = vmul.f32 %v144, %v62
    %v146 = vrot.slane %v145, 4
    %v147 = vadd.f32 %v145, %v146
    %v148 = vrot.slane %v147, 2
    %v149 = vadd.f32 %v147, %v148
    %v150 = vrot.slane %v149, 1
    %v151 = vadd.f32 %v149, %v150
    %v152 = vstv %s136
    %v153 = vadd.f32 %v151, %v152
    %v154 = vmul.f32 %v144, %v153
    %v155 = vmul.f32 %v154, 2.0
    %v156 = vsub.f32 %v62, %v155
    %v157 = vmul.f32 %v156, %v156
    %v158 = vrot.slane %v157, 4
    %v159 = vadd.f32 %v157, %v158
    %v160 = vrot.slane %v159, 2
    %v161 = vadd.f32 %v159, %v160
    %v162 = vrot.slane %v161, 1
    %v163 = vadd.f32 %v161, %v162
    %v164 = vmul.f32 %v45, %v156
    %v165 = vadd.f32 %v164, %v40
    %v166 = vmul.f32 %v43, %v163
    %v167 = vadd.f32 %v165, %v166
    %vm168 = vcmask 64512
    %v170 = vsel %vm168, %v46, 0
    %v173 = vsel %vm168, %v47, 0
    %v176 = vsel %vm168, %v48, 0
    %v179 = vsel %vm168, %v49, 0
    %v182 = vsel %vm168, %v50, 0
    %v185 = vsel %vm168, %v51, 0
    %v188 = vsel %vm168, %v52, 0
    %v191 = vsel %vm168, %v53, 0
    %v194 = vsel %vm168, %v54, 0
    %v197 = vsel %vm168, %v55, 0
    %v200 = vsel %vm168, %v56, 0
    %v203 = vsel %vm168, %v57, 0
    %v206 = vsel %vm168, %v58, 0
    %v209 = vsel %vm168, %v59, 0
    %v212 = vsel %vm168, %v60, 0
    %v215 = vsel %vm168, %v61, 0
    %217 = vmatprep.subr.mxu0 %v132
    %218 = vmatpush1.msra.mxu0 %v97
    %219 = vmatprep.subr.mxu0 0.0
    %220 = vmatpush1.msra.mxu0 0.0
    %221 = vmatprep.subr.mxu0 0.0
    %222 = vmatpush1.msra.mxu0 0.0
    %223 = vmatprep.subr.mxu0 0.0
    %224 = vmatpush1.msra.mxu0 0.0
    %225 = vmatprep.subr.mxu0 0.0
    %226 = vmatpush1.msra.mxu0 0.0
    %227 = vmatprep.subr.mxu0 0.0
    %228 = vmatpush1.msra.mxu0 0.0
    %229 = vmatprep.subr.mxu0 0.0
    %230 = vmatpush1.msra.mxu0 0.0
    %231 = vmatprep.subr.mxu0 0.0
    %232 = vmatpush1.msra.mxu0 0.0
    %233 = vmatprep.subr.mxu0 0.0
    %234 = vmatpush1.msra.mxu0 0.0
    %235 = vmatprep.subr.mxu0 0.0
    %236 = vmatpush1.msra.mxu0 0.0
    %237 = vmatprep.subr.mxu0 0.0
    %238 = vmatpush1.msra.mxu0 0.0
    %239 = vmatprep.subr.mxu0 0.0
    %240 = vmatpush1.msra.mxu0 0.0
    %241 = vmatprep.subr.mxu0 0.0
    %242 = vmatpush1.msra.mxu0 0.0
    %243 = vmatprep.subr.mxu0 0.0
    %244 = vmatpush1.msra.mxu0 0.0
    %245 = vmatprep.subr.mxu0 0.0
    %246 = vmatpush1.msra.mxu0 0.0
    %247 = vmatprep.subr.mxu0 0.0
    %248 = vmatpush1.msra.mxu0 0.0
    %249 = vmatprep.subr.mxu0 0.0
    %250 = vmatpush1.msra.mxu0 0.0
    %251 = vmatprep.subr.mxu0 0.0
    %252 = vmatpush1.msra.mxu0 0.0
    %253 = vmatprep.subr.mxu0 0.0
    %254 = vmatpush1.msra.mxu0 0.0
    %255 = vmatprep.subr.mxu0 0.0
    %256 = vmatpush1.msra.mxu0 0.0
    %257 = vmatprep.subr.mxu0 0.0
    %258 = vmatpush1.msra.mxu0 0.0
    %259 = vmatprep.subr.mxu0 0.0
    %260 = vmatpush1.msra.mxu0 0.0
    %261 = vmatprep.subr.mxu0 0.0
    %262 = vmatpush1.msra.mxu0 0.0
    %263 = vmatprep.subr.mxu0 0.0
    %264 = vmatpush1.msra.mxu0 0.0
    %265 = vmatprep.subr.mxu0 0.0
    %266 = vmatpush1.msra.mxu0 0.0
    %267 = vmatprep.subr.mxu0 0.0
    %268 = vmatpush1.msra.mxu0 0.0
    %269 = vmatprep.subr.mxu0 0.0
    %270 = vmatpush1.msra.mxu0 0.0
    %271 = vmatprep.subr.mxu0 0.0
    %272 = vmatpush1.msra.mxu0 0.0
    %273 = vmatprep.subr.mxu0 0.0
    %274 = vmatpush1.msra.mxu0 0.0
    %275 = vmatprep.subr.mxu0 0.0
    %276 = vmatpush1.msra.mxu0 0.0
    %277 = vmatprep.subr.mxu0 0.0
    %278 = vmatpush1.msra.mxu0 0.0
    %279 = vmatprep.subr.mxu0 0.0
    %280 = vmatpush1.msra.mxu0 0.0
    %281 = vmatprep.mubr.f32.mxu0 0.0
    %282 = vmatmul.mubr.f32.gmra.mrb[0].mxu0 %v170
    %v283 = vpop.f32.mrb[0].mxu0
    %v284 = vadd.f32 0.0, %v283
    %v285 = vpop.f32.mrb[0].mxu0
    %v286 = vadd.f32 0.0, %v285
    %287 = vmatprep.mubr.f32.mxu0 0.0
    %288 = vmatmul.mubr.f32.gmra.mrb[0].mxu0 %v173
    %v289 = vpop.f32.mrb[0].mxu0
    %v290 = vadd.f32 0.0, %v289
    %v291 = vpop.f32.mrb[0].mxu0
    %v292 = vadd.f32 0.0, %v291
    %293 = vmatprep.mubr.f32.mxu0 0.0
    %294 = vmatmul.mubr.f32.gmra.mrb[0].mxu0 %v176
    %v295 = vpop.f32.mrb[0].mxu0
    %v296 = vadd.f32 0.0, %v295
    %v297 = vpop.f32.mrb[0].mxu0
    %v298 = vadd.f32 0.0, %v297
    %299 = vmatprep.mubr.f32.mxu0 0.0
    %300 = vmatmul.mubr.f32.gmra.mrb[0].mxu0 %v179
    %v301 = vpop.f32.mrb[0].mxu0
    %v302 = vadd.f32 0.0, %v301
    %v303 = vpop.f32.mrb[0].mxu0
    %v304 = vadd.f32 0.0, %v303
    %305 = vmatprep.mubr.f32.mxu0 0.0
    %306 = vmatmul.mubr.f32.gmra.mrb[0].mxu0 %v182
    %v307 = vpop.f32.mrb[0].mxu0
    %v308 = vadd.f32 0.0, %v307
    %v309 = vpop.f32.mrb[0].mxu0
    %v310 = vadd.f32 0.0, %v309
    %311 = vmatprep.mubr.f32.mxu0 0.0
    %312 = vmatmul.mubr.f32.gmra.mrb[0].mxu0 %v185
    %v313 = vpop.f32.mrb[0].mxu0
    %v314 = vadd.f32 0.0, %v313
    %v315 = vpop.f32.mrb[0].mxu0
    %v316 = vadd.f32 0.0, %v315
    %317 = vmatprep.mubr.f32.mxu0 0.0
    %318 = vmatmul.mubr.f32.gmra.mrb[0].mxu0 %v188
    %v319 = vpop.f32.mrb[0].mxu0
    %v320 = vadd.f32 0.0, %v319
    %v321 = vpop.f32.mrb[0].mxu0
    %v322 = vadd.f32 0.0, %v321
    %323 = vmatprep.mubr.f32.mxu0 0.0
    %324 = vmatmul.mubr.f32.gmra.mrb[0].mxu0 %v191
    %v325 = vpop.f32.mrb[0].mxu0
    %v326 = vadd.f32 0.0, %v325
    %v327 = vpop.f32.mrb[0].mxu0
    %v328 = vadd.f32 0.0, %v327
    %329 = vmatprep.mubr.f32.mxu0 0.0
    %330 = vmatmul.mubr.f32.gmra.mrb[0].mxu0 %v194
    %v331 = vpop.f32.mrb[0].mxu0
    %v332 = vadd.f32 0.0, %v331
    %v333 = vpop.f32.mrb[0].mxu0
    %v334 = vadd.f32 0.0, %v333
    %335 = vmatprep.mubr.f32.mxu0 0.0
    %336 = vmatmul.mubr.f32.gmra.mrb[0].mxu0 %v197
    %v337 = vpop.f32.mrb[0].mxu0
    %v338 = vadd.f32 0.0, %v337
    %v339 = vpop.f32.mrb[0].mxu0
    %v340 = vadd.f32 0.0, %v339
    %341 = vmatprep.mubr.f32.mxu0 0.0
    %342 = vmatmul.mubr.f32.gmra.mrb[0].mxu0 %v200
    %v343 = vpop.f32.mrb[0].mxu0
    %v344 = vadd.f32 0.0, %v343
    %v345 = vpop.f32.mrb[0].mxu0
    %v346 = vadd.f32 0.0, %v345
    %347 = vmatprep.mubr.f32.mxu0 0.0
    %348 = vmatmul.mubr.f32.gmra.mrb[0].mxu0 %v203
    %v349 = vpop.f32.mrb[0].mxu0
    %v350 = vadd.f32 0.0, %v349
    %v351 = vpop.f32.mrb[0].mxu0
    %v352 = vadd.f32 0.0, %v351
    %353 = vmatprep.mubr.f32.mxu0 0.0
    %354 = vmatmul.mubr.f32.gmra.mrb[0].mxu0 %v206
    %v355 = vpop.f32.mrb[0].mxu0
    %v356 = vadd.f32 0.0, %v355
    %v357 = vpop.f32.mrb[0].mxu0
    %v358 = vadd.f32 0.0, %v357
    %359 = vmatprep.mubr.f32.mxu0 0.0
    %360 = vmatmul.mubr.f32.gmra.mrb[0].mxu0 %v209
    %v361 = vpop.f32.mrb[0].mxu0
    %v362 = vadd.f32 0.0, %v361
    %v363 = vpop.f32.mrb[0].mxu0
    %v364 = vadd.f32 0.0, %v363
    %365 = vmatprep.mubr.f32.mxu0 0.0
    %366 = vmatmul.mubr.f32.gmra.mrb[0].mxu0 %v212
    %v367 = vpop.f32.mrb[0].mxu0
    %v368 = vadd.f32 0.0, %v367
    %v369 = vpop.f32.mrb[0].mxu0
    %v370 = vadd.f32 0.0, %v369
    %371 = vmatprep.mubr.f32.mxu0 0.0
    %372 = vmatmul.mubr.f32.gmra.mrb[0].mxu0 %v215
    %v373 = vpop.f32.mrb[0].mxu0
    %v374 = vadd.f32 0.0, %v373
    %v375 = vpop.f32.mrb[0].mxu0
    %v376 = vadd.f32 0.0, %v375
    %377 = vdwg.mxu0
    %378 = vmatprep.subr.mxu0 0.0
    %379 = vmatpush1.msra.mxu0 %v167
    %380 = vmatprep.subr.mxu0 0.0
    %381 = vmatpush1.msra.mxu0 0.0
    %382 = vmatprep.subr.mxu0 0.0
    %383 = vmatpush1.msra.mxu0 0.0
    %384 = vmatprep.subr.mxu0 0.0
    %385 = vmatpush1.msra.mxu0 0.0
    %386 = vmatprep.subr.mxu0 0.0
    %387 = vmatpush1.msra.mxu0 0.0
    %388 = vmatprep.subr.mxu0 0.0
    %389 = vmatpush1.msra.mxu0 0.0
    %390 = vmatprep.subr.mxu0 0.0
    %391 = vmatpush1.msra.mxu0 0.0
    %392 = vmatprep.subr.mxu0 0.0
    %393 = vmatpush1.msra.mxu0 0.0
    %394 = vmatprep.subr.mxu0 0.0
    %395 = vmatpush1.msra.mxu0 0.0
    %396 = vmatprep.subr.mxu0 0.0
    %397 = vmatpush1.msra.mxu0 0.0
    %398 = vmatprep.subr.mxu0 0.0
    %399 = vmatpush1.msra.mxu0 0.0
    %400 = vmatprep.subr.mxu0 0.0
    %401 = vmatpush1.msra.mxu0 0.0
    %402 = vmatprep.subr.mxu0 0.0
    %403 = vmatpush1.msra.mxu0 0.0
    %404 = vmatprep.subr.mxu0 0.0
    %405 = vmatpush1.msra.mxu0 0.0
    %406 = vmatprep.subr.mxu0 0.0
    %407 = vmatpush1.msra.mxu0 0.0
    %408 = vmatprep.subr.mxu0 0.0
    %409 = vmatpush1.msra.mxu0 0.0
    %410 = vmatprep.subr.mxu0 0.0
    %411 = vmatpush1.msra.mxu0 0.0
    %412 = vmatprep.subr.mxu0 0.0
    %413 = vmatpush1.msra.mxu0 0.0
    %414 = vmatprep.subr.mxu0 0.0
    %415 = vmatpush1.msra.mxu0 0.0
    %416 = vmatprep.subr.mxu0 0.0
    %417 = vmatpush1.msra.mxu0 0.0
    %418 = vmatprep.subr.mxu0 0.0
    %419 = vmatpush1.msra.mxu0 0.0
    %420 = vmatprep.subr.mxu0 0.0
    %421 = vmatpush1.msra.mxu0 0.0
    %422 = vmatprep.subr.mxu0 0.0
    %423 = vmatpush1.msra.mxu0 0.0
    %424 = vmatprep.subr.mxu0 0.0
    %425 = vmatpush1.msra.mxu0 0.0
    %426 = vmatprep.subr.mxu0 0.0
    %427 = vmatpush1.msra.mxu0 0.0
    %428 = vmatprep.subr.mxu0 0.0
    %429 = vmatpush1.msra.mxu0 0.0
    %430 = vmatprep.subr.mxu0 0.0
    %431 = vmatpush1.msra.mxu0 0.0
    %432 = vmatprep.subr.mxu0 0.0
    %433 = vmatpush1.msra.mxu0 0.0
    %434 = vmatprep.subr.mxu0 0.0
    %435 = vmatpush1.msra.mxu0 0.0
    %436 = vmatprep.subr.mxu0 0.0
    %437 = vmatpush1.msra.mxu0 0.0
    %438 = vmatprep.subr.mxu0 0.0
    %439 = vmatpush1.msra.mxu0 0.0
    %440 = vmatprep.subr.mxu0 0.0
    %441 = vmatpush1.msra.mxu0 0.0
    %442 = vmatprep.mubr.f32.mxu0 0.0
    %443 = vmatmul.mubr.f32.gmra.mrb[0].mxu0 %v170
    %v444 = vpop.f32.mrb[0].mxu0
    %v445 = vadd.f32 0.0, %v444
    %v446 = vpop.f32.mrb[0].mxu0
    %447 = vmatprep.mubr.f32.mxu0 0.0
    %448 = vmatmul.mubr.f32.gmra.mrb[0].mxu0 %v173
    %v449 = vpop.f32.mrb[0].mxu0
    %v450 = vadd.f32 0.0, %v449
    %v451 = vpop.f32.mrb[0].mxu0
    %452 = vmatprep.mubr.f32.mxu0 0.0
    %453 = vmatmul.mubr.f32.gmra.mrb[0].mxu0 %v176
    %v454 = vpop.f32.mrb[0].mxu0
    %v455 = vadd.f32 0.0, %v454
    %v456 = vpop.f32.mrb[0].mxu0
    %457 = vmatprep.mubr.f32.mxu0 0.0
    %458 = vmatmul.mubr.f32.gmra.mrb[0].mxu0 %v179
    %v459 = vpop.f32.mrb[0].mxu0
    %v460 = vadd.f32 0.0, %v459
    %v461 = vpop.f32.mrb[0].mxu0
    %462 = vmatprep.mubr.f32.mxu0 0.0
    %463 = vmatmul.mubr.f32.gmra.mrb[0].mxu0 %v182
    %v464 = vpop.f32.mrb[0].mxu0
    %v465 = vadd.f32 0.0, %v464
    %v466 = vpop.f32.mrb[0].mxu0
    %467 = vmatprep.mubr.f32.mxu0 0.0
    %468 = vmatmul.mubr.f32.gmra.mrb[0].mxu0 %v185
    %v469 = vpop.f32.mrb[0].mxu0
    %v470 = vadd.f32 0.0, %v469
    %v471 = vpop.f32.mrb[0].mxu0
    %472 = vmatprep.mubr.f32.mxu0 0.0
    %473 = vmatmul.mubr.f32.gmra.mrb[0].mxu0 %v188
    %v474 = vpop.f32.mrb[0].mxu0
    %v475 = vadd.f32 0.0, %v474
    %v476 = vpop.f32.mrb[0].mxu0
    %477 = vmatprep.mubr.f32.mxu0 0.0
    %478 = vmatmul.mubr.f32.gmra.mrb[0].mxu0 %v191
    %v479 = vpop.f32.mrb[0].mxu0
    %v480 = vadd.f32 0.0, %v479
    %v481 = vpop.f32.mrb[0].mxu0
    %482 = vmatprep.mubr.f32.mxu0 0.0
    %483 = vmatmul.mubr.f32.gmra.mrb[0].mxu0 %v194
    %v484 = vpop.f32.mrb[0].mxu0
    %v485 = vadd.f32 0.0, %v484
    %v486 = vpop.f32.mrb[0].mxu0
    %487 = vmatprep.mubr.f32.mxu0 0.0
    %488 = vmatmul.mubr.f32.gmra.mrb[0].mxu0 %v197
    %v489 = vpop.f32.mrb[0].mxu0
    %v490 = vadd.f32 0.0, %v489
    %v491 = vpop.f32.mrb[0].mxu0
    %492 = vmatprep.mubr.f32.mxu0 0.0
    %493 = vmatmul.mubr.f32.gmra.mrb[0].mxu0 %v200
    %v494 = vpop.f32.mrb[0].mxu0
    %v495 = vadd.f32 0.0, %v494
    %v496 = vpop.f32.mrb[0].mxu0
    %497 = vmatprep.mubr.f32.mxu0 0.0
    %498 = vmatmul.mubr.f32.gmra.mrb[0].mxu0 %v203
    %v499 = vpop.f32.mrb[0].mxu0
    %v500 = vadd.f32 0.0, %v499
    %v501 = vpop.f32.mrb[0].mxu0
    %502 = vmatprep.mubr.f32.mxu0 0.0
    %503 = vmatmul.mubr.f32.gmra.mrb[0].mxu0 %v206
    %v504 = vpop.f32.mrb[0].mxu0
    %v505 = vadd.f32 0.0, %v504
    %v506 = vpop.f32.mrb[0].mxu0
    %507 = vmatprep.mubr.f32.mxu0 0.0
    %508 = vmatmul.mubr.f32.gmra.mrb[0].mxu0 %v209
    %v509 = vpop.f32.mrb[0].mxu0
    %v510 = vadd.f32 0.0, %v509
    %v511 = vpop.f32.mrb[0].mxu0
    %512 = vmatprep.mubr.f32.mxu0 0.0
    %513 = vmatmul.mubr.f32.gmra.mrb[0].mxu0 %v212
    %v514 = vpop.f32.mrb[0].mxu0
    %v515 = vadd.f32 0.0, %v514
    %v516 = vpop.f32.mrb[0].mxu0
    %517 = vmatprep.mubr.f32.mxu0 0.0
    %518 = vmatmul.mubr.f32.gmra.mrb[0].mxu0 %v215
    %v519 = vpop.f32.mrb[0].mxu0
    %v520 = vadd.f32 0.0, %v519
    %v521 = vpop.f32.mrb[0].mxu0
    %522 = vdwg.mxu0
    %v523 = vmax.f32 %v284, 0.0
    %v524 = vmax.f32 %v286, 0.0
    %v525 = vmax.f32 %v445, 0.0
    %v526 = vmax.f32 %v290, 0.0
    %v527 = vmax.f32 %v292, 0.0
    %v528 = vmax.f32 %v450, 0.0
    %v529 = vmax.f32 %v296, 0.0
    %v530 = vmax.f32 %v298, 0.0
    %v531 = vmax.f32 %v455, 0.0
    %v532 = vmax.f32 %v302, 0.0
    %v533 = vmax.f32 %v304, 0.0
    %v534 = vmax.f32 %v460, 0.0
    %v535 = vmax.f32 %v308, 0.0
    %v536 = vmax.f32 %v310, 0.0
    %v537 = vmax.f32 %v465, 0.0
    %v538 = vmax.f32 %v314, 0.0
    %v539 = vmax.f32 %v316, 0.0
    %v540 = vmax.f32 %v470, 0.0
    %v541 = vmax.f32 %v320, 0.0
    %v542 = vmax.f32 %v322, 0.0
    %v543 = vmax.f32 %v475, 0.0
    %v544 = vmax.f32 %v326, 0.0
    %v545 = vmax.f32 %v328, 0.0
    %v546 = vmax.f32 %v480, 0.0
    %v547 = vmax.f32 %v332, 0.0
    %v548 = vmax.f32 %v334, 0.0
    %v549 = vmax.f32 %v485, 0.0
    %v550 = vmax.f32 %v338, 0.0
    %v551 = vmax.f32 %v340, 0.0
    %v552 = vmax.f32 %v490, 0.0
    %v553 = vmax.f32 %v344, 0.0
    %v554 = vmax.f32 %v346, 0.0
    %v555 = vmax.f32 %v495, 0.0
    %v556 = vmax.f32 %v350, 0.0
    %v557 = vmax.f32 %v352, 0.0
    %v558 = vmax.f32 %v500, 0.0
    %v559 = vmax.f32 %v356, 0.0
    %v560 = vmax.f32 %v358, 0.0
    %v561 = vmax.f32 %v505, 0.0
    %v562 = vmax.f32 %v362, 0.0
    %v563 = vmax.f32 %v364, 0.0
    %v564 = vmax.f32 %v510, 0.0
    %v565 = vmax.f32 %v368, 0.0
    %v566 = vmax.f32 %v370, 0.0
    %v567 = vmax.f32 %v515, 0.0
    %v568 = vmax.f32 %v374, 0.0
    %v569 = vmax.f32 %v376, 0.0
    %v570 = vmax.f32 %v520, 0.0
    %v571 = vmin.f32 %v523, %v529
    %v572 = vmin.f32 %v526, %v532
    %v573 = vmin.f32 %v571, %v535
    %v574 = vmin.f32 %v572, %v538
    %v575 = vmin.f32 %v573, %v541
    %v576 = vmin.f32 %v574, %v544
    %v577 = vmin.f32 %v575, %v547
    %v578 = vmin.f32 %v576, %v550
    %v579 = vmin.f32 %v577, %v553
    %v580 = vmin.f32 %v578, %v556
    %v581 = vmin.f32 %v579, %v559
    %v582 = vmin.f32 %v580, %v562
    %v583 = vmin.f32 %v581, %v565
    %v584 = vmin.f32 %v582, %v568
    %v585 = vmin.f32 %v583, %v584
    %v586 = vrot.slane %v585, 4
    %v587 = vmin.f32 %v585, %v586
    %v588 = vrot.slane %v587, 2
    %v589 = vmin.f32 %v587, %v588
    %v590 = vrot.slane %v589, 1
    %v591 = vmin.f32 %v589, %v590
    %v592 = vmin.f32 %v524, %v530
    %v593 = vmin.f32 %v527, %v533
    %v594 = vmin.f32 %v592, %v536
    %v595 = vmin.f32 %v593, %v539
    %v596 = vmin.f32 %v594, %v542
    %v597 = vmin.f32 %v595, %v545
    %v598 = vmin.f32 %v596, %v548
    %v599 = vmin.f32 %v597, %v551
    %v600 = vmin.f32 %v598, %v554
    %v601 = vmin.f32 %v599, %v557
    %v602 = vmin.f32 %v600, %v560
    %v603 = vmin.f32 %v601, %v563
    %v604 = vmin.f32 %v602, %v566
    %v605 = vmin.f32 %v603, %v569
    %v606 = vmin.f32 %v604, %v605
    %v607 = vrot.slane %v606, 4
    %v608 = vmin.f32 %v606, %v607
    %v609 = vrot.slane %v608, 2
    %v610 = vmin.f32 %v608, %v609
    %v611 = vrot.slane %v610, 1
    %v612 = vmin.f32 %v610, %v611
    %v613 = vmin.f32 %v525, %v531
    %v614 = vmin.f32 %v528, %v534
    %v615 = vmin.f32 %v613, %v537
    %v616 = vmin.f32 %v614, %v540
    %v617 = vmin.f32 %v615, %v543
    %v618 = vmin.f32 %v616, %v546
    %v619 = vmin.f32 %v617, %v549
    %v620 = vmin.f32 %v618, %v552
    %v621 = vmin.f32 %v619, %v555
    %v622 = vmin.f32 %v620, %v558
    %v623 = vmin.f32 %v621, %v561
    %v624 = vmin.f32 %v622, %v564
    %v625 = vmin.f32 %v623, %v567
    %v626 = vmin.f32 %v624, %v570
    %v627 = vmin.f32 %v625, %v626
    %v628 = vrot.slane %v627, 4
    %v629 = vmin.f32 %v627, %v628
    %v630 = vrot.slane %v629, 2
    %v631 = vmin.f32 %v629, %v630
    %v632 = vrot.slane %v631, 1
    %v633 = vmin.f32 %v631, %v632
    %v634 = vadd.f32 %v591, 0.0
    %v635 = vadd.f32 %v612, 0.0
    %v636 = vadd.f32 %v633, 0.0
    %637 = vmin.xlane.f32.xlu0 %v523
    %v638 = vpop.xlane.xlu0 %637
    %639 = vmin.xlane.f32.xlu0 %v526
    %v640 = vpop.xlane.xlu0 %639
    %641 = vmin.xlane.f32.xlu0 %v529
    %v642 = vpop.xlane.xlu0 %641
    %643 = vmin.xlane.f32.xlu0 %v532
    %v644 = vpop.xlane.xlu0 %643
    %645 = vmin.xlane.f32.xlu0 %v535
    %v646 = vpop.xlane.xlu0 %645
    %647 = vmin.xlane.f32.xlu0 %v538
    %v648 = vpop.xlane.xlu0 %647
    %649 = vmin.xlane.f32.xlu0 %v541
    %v650 = vpop.xlane.xlu0 %649
    %651 = vmin.xlane.f32.xlu0 %v544
    %v652 = vpop.xlane.xlu0 %651
    %653 = vmin.xlane.f32.xlu0 %v547
    %v654 = vpop.xlane.xlu0 %653
    %655 = vmin.xlane.f32.xlu0 %v550
    %v656 = vpop.xlane.xlu0 %655
    %657 = vmin.xlane.f32.xlu0 %v553
    %v658 = vpop.xlane.xlu0 %657
    %659 = vmin.xlane.f32.xlu0 %v556
    %v660 = vpop.xlane.xlu0 %659
    %661 = vmin.xlane.f32.xlu0 %v559
    %v662 = vpop.xlane.xlu0 %661
    %663 = vmin.xlane.f32.xlu0 %v562
    %v664 = vpop.xlane.xlu0 %663
    %665 = vmin.xlane.f32.xlu0 %v565
    %v666 = vpop.xlane.xlu0 %665
    %667 = vmin.xlane.f32.xlu0 %v568
    %v668 = vpop.xlane.xlu0 %667
    %v669 = vadd.f32 %v638, 0.0
    %v670 = vadd.f32 %v640, 0.0
    %v671 = vadd.f32 %v642, 0.0
    %v672 = vadd.f32 %v644, 0.0
    %v673 = vadd.f32 %v646, 0.0
    %v674 = vadd.f32 %v648, 0.0
    %v675 = vadd.f32 %v650, 0.0
    %v676 = vadd.f32 %v652, 0.0
    %v677 = vadd.f32 %v654, 0.0
    %v678 = vadd.f32 %v656, 0.0
    %v679 = vadd.f32 %v658, 0.0
    %v680 = vadd.f32 %v660, 0.0
    %v681 = vadd.f32 %v662, 0.0
    %v682 = vadd.f32 %v664, 0.0
    %v683 = vadd.f32 %v666, 0.0
    %v684 = vadd.f32 %v668, 0.0
    %685 = vmin.xlane.f32.xlu0 %v524
    %v686 = vpop.xlane.xlu0 %685
    %687 = vmin.xlane.f32.xlu0 %v527
    %v688 = vpop.xlane.xlu0 %687
    %689 = vmin.xlane.f32.xlu0 %v530
    %v690 = vpop.xlane.xlu0 %689
    %691 = vmin.xlane.f32.xlu0 %v533
    %v692 = vpop.xlane.xlu0 %691
    %693 = vmin.xlane.f32.xlu0 %v536
    %v694 = vpop.xlane.xlu0 %693
    %695 = vmin.xlane.f32.xlu0 %v539
    %v696 = vpop.xlane.xlu0 %695
    %697 = vmin.xlane.f32.xlu0 %v542
    %v698 = vpop.xlane.xlu0 %697
    %699 = vmin.xlane.f32.xlu0 %v545
    %v700 = vpop.xlane.xlu0 %699
    %701 = vmin.xlane.f32.xlu0 %v548
    %v702 = vpop.xlane.xlu0 %701
    %703 = vmin.xlane.f32.xlu0 %v551
    %v704 = vpop.xlane.xlu0 %703
    %705 = vmin.xlane.f32.xlu0 %v554
    %v706 = vpop.xlane.xlu0 %705
    %707 = vmin.xlane.f32.xlu0 %v557
    %v708 = vpop.xlane.xlu0 %707
    %709 = vmin.xlane.f32.xlu0 %v560
    %v710 = vpop.xlane.xlu0 %709
    %711 = vmin.xlane.f32.xlu0 %v563
    %v712 = vpop.xlane.xlu0 %711
    %713 = vmin.xlane.f32.xlu0 %v566
    %v714 = vpop.xlane.xlu0 %713
    %715 = vmin.xlane.f32.xlu0 %v569
    %v716 = vpop.xlane.xlu0 %715
    %v717 = vadd.f32 %v669, %v686
    %v718 = vadd.f32 %v670, %v688
    %v719 = vadd.f32 %v671, %v690
    %v720 = vadd.f32 %v672, %v692
    %v721 = vadd.f32 %v673, %v694
    %v722 = vadd.f32 %v674, %v696
    %v723 = vadd.f32 %v675, %v698
    %v724 = vadd.f32 %v676, %v700
    %v725 = vadd.f32 %v677, %v702
    %v726 = vadd.f32 %v678, %v704
    %v727 = vadd.f32 %v679, %v706
    %v728 = vadd.f32 %v680, %v708
    %v729 = vadd.f32 %v681, %v710
    %v730 = vadd.f32 %v682, %v712
    %v731 = vadd.f32 %v683, %v714
    %v732 = vadd.f32 %v684, %v716
    %733 = vmin.xlane.f32.xlu0 %v525
    %v734 = vpop.xlane.xlu0 %733
    %735 = vmin.xlane.f32.xlu0 %v528
    %v736 = vpop.xlane.xlu0 %735
    %737 = vmin.xlane.f32.xlu0 %v531
    %v738 = vpop.xlane.xlu0 %737
    %739 = vmin.xlane.f32.xlu0 %v534
    %v740 = vpop.xlane.xlu0 %739
    %741 = vmin.xlane.f32.xlu0 %v537
    %v742 = vpop.xlane.xlu0 %741
    %743 = vmin.xlane.f32.xlu0 %v540
    %v744 = vpop.xlane.xlu0 %743
    %745 = vmin.xlane.f32.xlu0 %v543
    %v746 = vpop.xlane.xlu0 %745
    %747 = vmin.xlane.f32.xlu0 %v546
    %v748 = vpop.xlane.xlu0 %747
    %749 = vmin.xlane.f32.xlu0 %v549
    %v750 = vpop.xlane.xlu0 %749
    %751 = vmin.xlane.f32.xlu0 %v552
    %v752 = vpop.xlane.xlu0 %751
    %753 = vmin.xlane.f32.xlu0 %v555
    %v754 = vpop.xlane.xlu0 %753
    %755 = vmin.xlane.f32.xlu0 %v558
    %v756 = vpop.xlane.xlu0 %755
    %757 = vmin.xlane.f32.xlu0 %v561
    %v758 = vpop.xlane.xlu0 %757
    %759 = vmin.xlane.f32.xlu0 %v564
    %v760 = vpop.xlane.xlu0 %759
    %761 = vmin.xlane.f32.xlu0 %v567
    %v762 = vpop.xlane.xlu0 %761
    %763 = vmin.xlane.f32.xlu0 %v570
    %v764 = vpop.xlane.xlu0 %763
    %v765 = vadd.f32 %v717, %v734
    %v766 = vadd.f32 %v718, %v736
    %v767 = vadd.f32 %v719, %v738
    %v768 = vadd.f32 %v720, %v740
    %v769 = vadd.f32 %v721, %v742
    %v770 = vadd.f32 %v722, %v744
    %v771 = vadd.f32 %v723, %v746
    %v772 = vadd.f32 %v724, %v748
    %v773 = vadd.f32 %v725, %v750
    %v774 = vadd.f32 %v726, %v752
    %v775 = vadd.f32 %v727, %v754
    %v776 = vadd.f32 %v728, %v756
    %v777 = vadd.f32 %v729, %v758
    %v778 = vadd.f32 %v730, %v760
    %v779 = vadd.f32 %v731, %v762
    %v780 = vadd.f32 %v732, %v764
    %s781 = scalar_lea.vmem %s0, 128
    %v782 = vld [vmem:[%s781] sm:$0xff]
    %v783 = vld [vmem:[%s781 + $0x8] sm:$0xff]
    %v784 = vld [vmem:[%s781 + $0x10] sm:$0xff]
    %v785 = vld [vmem:[%s781 + $0x18] sm:$0xff]
    %v786 = vld [vmem:[%s781 + $0x20] sm:$0xff]
    %v787 = vld [vmem:[%s781 + $0x28] sm:$0xff]
    %v788 = vld [vmem:[%s781 + $0x30] sm:$0xff]
    %v789 = vld [vmem:[%s781 + $0x38] sm:$0xff]
    %v790 = vld [vmem:[%s781 + $0x40] sm:$0xff]
    %v791 = vld [vmem:[%s781 + $0x48] sm:$0xff]
    %v792 = vld [vmem:[%s781 + $0x50] sm:$0xff]
    %v793 = vld [vmem:[%s781 + $0x58] sm:$0xff]
    %v794 = vld [vmem:[%s781 + $0x60] sm:$0xff]
    %v795 = vld [vmem:[%s781 + $0x68] sm:$0xff]
    %v796 = vld [vmem:[%s781 + $0x70] sm:$0xff]
    %v797 = vld [vmem:[%s781 + $0x78] sm:$0xff]
    %s798 = scalar_lea.vmem %s1, 8
    %v799 = vld [vmem:[%s798] sm:$0xff]
    %s800 = sld [smem:[#allocation2 + $0x80]]
    %s801 = sld [smem:[#allocation2 + $0x81]]
    %s802 = sld [smem:[#allocation2 + $0x82]]
    %s803 = sld [smem:[#allocation2 + $0x83]]
    %v804 = vstv %s800
    %v805 = vmul.f32 %v31, %v804
    %v806 = vstv %s801
    %v807 = vmul.f32 %v34, %v806
    %v808 = vadd.f32 %v805, %v807
    %v809 = vstv %s802
    %v810 = vmul.f32 %v37, %v809
    %v811 = vadd.f32 %v808, %v810
    %v812 = vmul.f32 %v811, %v799
    %v813 = vrot.slane %v812, 4
    %v814 = vadd.f32 %v812, %v813
    %v815 = vrot.slane %v814, 2
    %v816 = vadd.f32 %v814, %v815
    %v817 = vrot.slane %v816, 1
    %v818 = vadd.f32 %v816, %v817
    %v819 = vstv %s803
    %v820 = vadd.f32 %v818, %v819
    %v821 = vmul.f32 %v811, %v820
    %v822 = vmul.f32 %v821, 2.0
    %v823 = vsub.f32 %v799, %v822
    %v824 = vmul.f32 %v823, %v823
    %v825 = vrot.slane %v824, 4
    %v826 = vadd.f32 %v824, %v825
    %v827 = vrot.slane %v826, 2
    %v828 = vadd.f32 %v826, %v827
    %v829 = vrot.slane %v828, 1
    %v830 = vadd.f32 %v828, %v829
    %v831 = vmul.f32 %v45, %v823
    %v832 = vadd.f32 %v831, %v40
    %v833 = vmul.f32 %v43, %v830
    %v834 = vadd.f32 %v832, %v833
    %s835 = sld [smem:[#allocation2 + $0x84]]
    %s836 = sld [smem:[#allocation2 + $0x85]]
    %s837 = sld [smem:[#allocation2 + $0x86]]
    %s838 = sld [smem:[#allocation2 + $0x87]]
    %v839 = vstv %s835
    %v840 = vmul.f32 %v31, %v839
    %v841 = vstv %s836
    %v842 = vmul.f32 %v34, %v841
    %v843 = vadd.f32 %v840, %v842
    %v844 = vstv %s837
    %v845 = vmul.f32 %v37, %v844
    %v846 = vadd.f32 %v843, %v845
    %v847 = vmul.f32 %v846, %v799
    %v848 = vrot.slane %v847, 4
    %v849 = vadd.f32 %v847, %v848
    %v850 = vrot.slane %v849, 2
    %v851 = vadd.f32 %v849, %v850
    %v852 = vrot.slane %v851, 1
    %v853 = vadd.f32 %v851, %v852
    %v854 = vstv %s838
    %v855 = vadd.f32 %v853, %v854
    %v856 = vmul.f32 %v846, %v855
    %v857 = vmul.f32 %v856, 2.0
    %v858 = vsub.f32 %v799, %v857
    %v859 = vmul.f32 %v858, %v858
    %v860 = vrot.slane %v859, 4
    %v861 = vadd.f32 %v859, %v860
    %v862 = vrot.slane %v861, 2
    %v863 = vadd.f32 %v861, %v862
    %v864 = vrot.slane %v863, 1
    %v865 = vadd.f32 %v863, %v864
    %v866 = vmul.f32 %v45, %v858
    %v867 = vadd.f32 %v866, %v40
    %v868 = vmul.f32 %v43, %v865
    %v869 = vadd.f32 %v867, %v868
    %s870 = sld [smem:[#allocation2 + $0x88]]
    %s871 = sld [smem:[#allocation2 + $0x89]]
    %s872 = sld [smem:[#allocation2 + $0x8a]]
    %s873 = sld [smem:[#allocation2 + $0x8b]]
    %v874 = vstv %s870
    %v875 = vmul.f32 %v31, %v874
    %v876 = vstv %s871
    %v877 = vmul.f32 %v34, %v876
    %v878 = vadd.f32 %v875, %v877
    %v879 = vstv %s872
    %v880 = vmul.f32 %v37, %v879
    %v881 = vadd.f32 %v878, %v880
    %v882 = vmul.f32 %v881, %v799
    %v883 = vrot.slane %v882, 4
    %v884 = vadd.f32 %v882, %v883
    %v885 = vrot.slane %v884, 2
    %v886 = vadd.f32 %v884, %v885
    %v887 = vrot.slane %v886, 1
    %v888 = vadd.f32 %v886, %v887
    %v889 = vstv %s873
    %v890 = vadd.f32 %v888, %v889
    %v891 = vmul.f32 %v881, %v890
    %v892 = vmul.f32 %v891, 2.0
    %v893 = vsub.f32 %v799, %v892
    %v894 = vmul.f32 %v893, %v893
    %v895 = vrot.slane %v894, 4
    %v896 = vadd.f32 %v894, %v895
    %v897 = vrot.slane %v896, 2
    %v898 = vadd.f32 %v896, %v897
    %v899 = vrot.slane %v898, 1
    %v900 = vadd.f32 %v898, %v899
    %v901 = vmul.f32 %v45, %v893
    %v902 = vadd.f32 %v901, %v40
    %v903 = vmul.f32 %v43, %v900
    %v904 = vadd.f32 %v902, %v903
    %v906 = vsel %vm168, %v782, 0
    %v909 = vsel %vm168, %v783, 0
    %v912 = vsel %vm168, %v784, 0
    %v915 = vsel %vm168, %v785, 0
    %v918 = vsel %vm168, %v786, 0
    %v921 = vsel %vm168, %v787, 0
    %v924 = vsel %vm168, %v788, 0
    %v927 = vsel %vm168, %v789, 0
    %v930 = vsel %vm168, %v790, 0
    %v933 = vsel %vm168, %v791, 0
    %v936 = vsel %vm168, %v792, 0
    %v939 = vsel %vm168, %v793, 0
    %v942 = vsel %vm168, %v794, 0
    %v945 = vsel %vm168, %v795, 0
    %v948 = vsel %vm168, %v796, 0
    %v951 = vsel %vm168, %v797, 0
    %953 = vmatprep.subr.mxu0 %v869
    %954 = vmatpush1.msra.mxu0 %v834
    %955 = vmatprep.subr.mxu0 0.0
    %956 = vmatpush1.msra.mxu0 0.0
    %957 = vmatprep.subr.mxu0 0.0
    %958 = vmatpush1.msra.mxu0 0.0
    %959 = vmatprep.subr.mxu0 0.0
    %960 = vmatpush1.msra.mxu0 0.0
    %961 = vmatprep.subr.mxu0 0.0
    %962 = vmatpush1.msra.mxu0 0.0
    %963 = vmatprep.subr.mxu0 0.0
    %964 = vmatpush1.msra.mxu0 0.0
    %965 = vmatprep.subr.mxu0 0.0
    %966 = vmatpush1.msra.mxu0 0.0
    %967 = vmatprep.subr.mxu0 0.0
    %968 = vmatpush1.msra.mxu0 0.0
    %969 = vmatprep.subr.mxu0 0.0
    %970 = vmatpush1.msra.mxu0 0.0
    %971 = vmatprep.subr.mxu0 0.0
    %972 = vmatpush1.msra.mxu0 0.0
    %973 = vmatprep.subr.mxu0 0.0
    %974 = vmatpush1.msra.mxu0 0.0
    %975 = vmatprep.subr.mxu0 0.0
    %976 = vmatpush1.msra.mxu0 0.0
    %977 = vmatprep.subr.mxu0 0.0
    %978 = vmatpush1.msra.mxu0 0.0
    %979 = vmatprep.subr.mxu0 0.0
    %980 = vmatpush1.msra.mxu0 0.0
    %981 = vmatprep.subr.mxu0 0.0
    %982 = vmatpush1.msra.mxu0 0.0
    %983 = vmatprep.subr.mxu0 0.0
    %984 = vmatpush1.msra.mxu0 0.0
    %985 = vmatprep.subr.mxu0 0.0
    %986 = vmatpush1.msra.mxu0 0.0
    %987 = vmatprep.subr.mxu0 0.0
    %988 = vmatpush1.msra.mxu0 0.0
    %989 = vmatprep.subr.mxu0 0.0
    %990 = vmatpush1.msra.mxu0 0.0
    %991 = vmatprep.subr.mxu0 0.0
    %992 = vmatpush1.msra.mxu0 0.0
    %993 = vmatprep.subr.mxu0 0.0
    %994 = vmatpush1.msra.mxu0 0.0
    %995 = vmatprep.subr.mxu0 0.0
    %996 = vmatpush1.msra.mxu0 0.0
    %997 = vmatprep.subr.mxu0 0.0
    %998 = vmatpush1.msra.mxu0 0.0
    %999 = vmatprep.subr.mxu0 0.0
    %1000 = vmatpush1.msra.mxu0 0.0
    %1001 = vmatprep.subr.mxu0 0.0
    %1002 = vmatpush1.msra.mxu0 0.0
    %1003 = vmatprep.subr.mxu0 0.0
    %1004 = vmatpush1.msra.mxu0 0.0
    %1005 = vmatprep.subr.mxu0 0.0
    %1006 = vmatpush1.msra.mxu0 0.0
    %1007 = vmatprep.subr.mxu0 0.0
    %1008 = vmatpush1.msra.mxu0 0.0
    %1009 = vmatprep.subr.mxu0 0.0
    %1010 = vmatpush1.msra.mxu0 0.0
    %1011 = vmatprep.subr.mxu0 0.0
    %1012 = vmatpush1.msra.mxu0 0.0
    %1013 = vmatprep.subr.mxu0 0.0
    %1014 = vmatpush1.msra.mxu0 0.0
    %1015 = vmatprep.subr.mxu0 0.0
    %1016 = vmatpush1.msra.mxu0 0.0
    %1017 = vmatprep.mubr.f32.mxu0 0.0
    %1018 = vmatmul.mubr.f32.gmra.mrb[0].mxu0 %v906
    %v1019 = vpop.f32.mrb[0].mxu0
    %v1020 = vadd.f32 0.0, %v1019
    %v1021 = vpop.f32.mrb[0].mxu0
    %v1022 = vadd.f32 0.0, %v1021
    %1023 = vmatprep.mubr.f32.mxu0 0.0
    %1024 = vmatmul.mubr.f32.gmra.mrb[0].mxu0 %v909
    %v1025 = vpop.f32.mrb[0].mxu0
    %v1026 = vadd.f32 0.0, %v1025
    %v1027 = vpop.f32.mrb[0].mxu0
    %v1028 = vadd.f32 0.0, %v1027
    %1029 = vmatprep.mubr.f32.mxu0 0.0
    %1030 = vmatmul.mubr.f32.gmra.mrb[0].mxu0 %v912
    %v1031 = vpop.f32.mrb[0].mxu0
    %v1032 = vadd.f32 0.0, %v1031
    %v1033 = vpop.f32.mrb[0].mxu0
    %v1034 = vadd.f32 0.0, %v1033
    %1035 = vmatprep.mubr.f32.mxu0 0.0
    %1036 = vmatmul.mubr.f32.gmra.mrb[0].mxu0 %v915
    %v1037 = vpop.f32.mrb[0].mxu0
    %v1038 = vadd.f32 0.0, %v1037
    %v1039 = vpop.f32.mrb[0].mxu0
    %v1040 = vadd.f32 0.0, %v1039
    %1041 = vmatprep.mubr.f32.mxu0 0.0
    %1042 = vmatmul.mubr.f32.gmra.mrb[0].mxu0 %v918
    %v1043 = vpop.f32.mrb[0].mxu0
    %v1044 = vadd.f32 0.0, %v1043
    %v1045 = vpop.f32.mrb[0].mxu0
    %v1046 = vadd.f32 0.0, %v1045
    %1047 = vmatprep.mubr.f32.mxu0 0.0
    %1048 = vmatmul.mubr.f32.gmra.mrb[0].mxu0 %v921
    %v1049 = vpop.f32.mrb[0].mxu0
    %v1050 = vadd.f32 0.0, %v1049
    %v1051 = vpop.f32.mrb[0].mxu0
    %v1052 = vadd.f32 0.0, %v1051
    %1053 = vmatprep.mubr.f32.mxu0 0.0
    %1054 = vmatmul.mubr.f32.gmra.mrb[0].mxu0 %v924
    %v1055 = vpop.f32.mrb[0].mxu0
    %v1056 = vadd.f32 0.0, %v1055
    %v1057 = vpop.f32.mrb[0].mxu0
    %v1058 = vadd.f32 0.0, %v1057
    %1059 = vmatprep.mubr.f32.mxu0 0.0
    %1060 = vmatmul.mubr.f32.gmra.mrb[0].mxu0 %v927
    %v1061 = vpop.f32.mrb[0].mxu0
    %v1062 = vadd.f32 0.0, %v1061
    %v1063 = vpop.f32.mrb[0].mxu0
    %v1064 = vadd.f32 0.0, %v1063
    %1065 = vmatprep.mubr.f32.mxu0 0.0
    %1066 = vmatmul.mubr.f32.gmra.mrb[0].mxu0 %v930
    %v1067 = vpop.f32.mrb[0].mxu0
    %v1068 = vadd.f32 0.0, %v1067
    %v1069 = vpop.f32.mrb[0].mxu0
    %v1070 = vadd.f32 0.0, %v1069
    %1071 = vmatprep.mubr.f32.mxu0 0.0
    %1072 = vmatmul.mubr.f32.gmra.mrb[0].mxu0 %v933
    %v1073 = vpop.f32.mrb[0].mxu0
    %v1074 = vadd.f32 0.0, %v1073
    %v1075 = vpop.f32.mrb[0].mxu0
    %v1076 = vadd.f32 0.0, %v1075
    %1077 = vmatprep.mubr.f32.mxu0 0.0
    %1078 = vmatmul.mubr.f32.gmra.mrb[0].mxu0 %v936
    %v1079 = vpop.f32.mrb[0].mxu0
    %v1080 = vadd.f32 0.0, %v1079
    %v1081 = vpop.f32.mrb[0].mxu0
    %v1082 = vadd.f32 0.0, %v1081
    %1083 = vmatprep.mubr.f32.mxu0 0.0
    %1084 = vmatmul.mubr.f32.gmra.mrb[0].mxu0 %v939
    %v1085 = vpop.f32.mrb[0].mxu0
    %v1086 = vadd.f32 0.0, %v1085
    %v1087 = vpop.f32.mrb[0].mxu0
    %v1088 = vadd.f32 0.0, %v1087
    %1089 = vmatprep.mubr.f32.mxu0 0.0
    %1090 = vmatmul.mubr.f32.gmra.mrb[0].mxu0 %v942
    %v1091 = vpop.f32.mrb[0].mxu0
    %v1092 = vadd.f32 0.0, %v1091
    %v1093 = vpop.f32.mrb[0].mxu0
    %v1094 = vadd.f32 0.0, %v1093
    %1095 = vmatprep.mubr.f32.mxu0 0.0
    %1096 = vmatmul.mubr.f32.gmra.mrb[0].mxu0 %v945
    %v1097 = vpop.f32.mrb[0].mxu0
    %v1098 = vadd.f32 0.0, %v1097
    %v1099 = vpop.f32.mrb[0].mxu0
    %v1100 = vadd.f32 0.0, %v1099
    %1101 = vmatprep.mubr.f32.mxu0 0.0
    %1102 = vmatmul.mubr.f32.gmra.mrb[0].mxu0 %v948
    %v1103 = vpop.f32.mrb[0].mxu0
    %v1104 = vadd.f32 0.0, %v1103
    %v1105 = vpop.f32.mrb[0].mxu0
    %v1106 = vadd.f32 0.0, %v1105
    %1107 = vmatprep.mubr.f32.mxu0 0.0
    %1108 = vmatmul.mubr.f32.gmra.mrb[0].mxu0 %v951
    %v1109 = vpop.f32.mrb[0].mxu0
    %v1110 = vadd.f32 0.0, %v1109
    %v1111 = vpop.f32.mrb[0].mxu0
    %v1112 = vadd.f32 0.0, %v1111
    %1113 = vdwg.mxu0
    %1114 = vmatprep.subr.mxu0 0.0
    %1115 = vmatpush1.msra.mxu0 %v904
    %1116 = vmatprep.subr.mxu0 0.0
    %1117 = vmatpush1.msra.mxu0 0.0
    %1118 = vmatprep.subr.mxu0 0.0
    %1119 = vmatpush1.msra.mxu0 0.0
    %1120 = vmatprep.subr.mxu0 0.0
    %1121 = vmatpush1.msra.mxu0 0.0
    %1122 = vmatprep.subr.mxu0 0.0
    %1123 = vmatpush1.msra.mxu0 0.0
    %1124 = vmatprep.subr.mxu0 0.0
    %1125 = vmatpush1.msra.mxu0 0.0
    %1126 = vmatprep.subr.mxu0 0.0
    %1127 = vmatpush1.msra.mxu0 0.0
    %1128 = vmatprep.subr.mxu0 0.0
    %1129 = vmatpush1.msra.mxu0 0.0
    %1130 = vmatprep.subr.mxu0 0.0
    %1131 = vmatpush1.msra.mxu0 0.0
    %1132 = vmatprep.subr.mxu0 0.0
    %1133 = vmatpush1.msra.mxu0 0.0
    %1134 = vmatprep.subr.mxu0 0.0
    %1135 = vmatpush1.msra.mxu0 0.0
    %1136 = vmatprep.subr.mxu0 0.0
    %1137 = vmatpush1.msra.mxu0 0.0
    %1138 = vmatprep.subr.mxu0 0.0
    %1139 = vmatpush1.msra.mxu0 0.0
    %1140 = vmatprep.subr.mxu0 0.0
    %1141 = vmatpush1.msra.mxu0 0.0
    %1142 = vmatprep.subr.mxu0 0.0
    %1143 = vmatpush1.msra.mxu0 0.0
    %1144 = vmatprep.subr.mxu0 0.0
    %1145 = vmatpush1.msra.mxu0 0.0
    %1146 = vmatprep.subr.mxu0 0.0
    %1147 = vmatpush1.msra.mxu0 0.0
    %1148 = vmatprep.subr.mxu0 0.0
    %1149 = vmatpush1.msra.mxu0 0.0
    %1150 = vmatprep.subr.mxu0 0.0
    %1151 = vmatpush1.msra.mxu0 0.0
    %1152 = vmatprep.subr.mxu0 0.0
    %1153 = vmatpush1.msra.mxu0 0.0
    %1154 = vmatprep.subr.mxu0 0.0
    %1155 = vmatpush1.msra.mxu0 0.0
    %1156 = vmatprep.subr.mxu0 0.0
    %1157 = vmatpush1.msra.mxu0 0.0
    %1158 = vmatprep.subr.mxu0 0.0
    %1159 = vmatpush1.msra.mxu0 0.0
    %1160 = vmatprep.subr.mxu0 0.0
    %1161 = vmatpush1.msra.mxu0 0.0
    %1162 = vmatprep.subr.mxu0 0.0
    %1163 = vmatpush1.msra.mxu0 0.0
    %1164 = vmatprep.subr.mxu0 0.0
    %1165 = vmatpush1.msra.mxu0 0.0
    %1166 = vmatprep.subr.mxu0 0.0
    %1167 = vmatpush1.msra.mxu0 0.0
    %1168 = vmatprep.subr.mxu0 0.0
    %1169 = vmatpush1.msra.mxu0 0.0
    %1170 = vmatprep.subr.mxu0 0.0
    %1171 = vmatpush1.msra.mxu0 0.0
    %1172 = vmatprep.subr.mxu0 0.0
    %1173 = vmatpush1.msra.mxu0 0.0
    %1174 = vmatprep.subr.mxu0 0.0
    %1175 = vmatpush1.msra.mxu0 0.0
    %1176 = vmatprep.subr.mxu0 0.0
    %1177 = vmatpush1.msra.mxu0 0.0
    %1178 = vmatprep.mubr.f32.mxu0 0.0
    %1179 = vmatmul.mubr.f32.gmra.mrb[0].mxu0 %v906
    %v1180 = vpop.f32.mrb[0].mxu0
    %v1181 = vadd.f32 0.0, %v1180
    %v1182 = vpop.f32.mrb[0].mxu0
    %1183 = vmatprep.mubr.f32.mxu0 0.0
    %1184 = vmatmul.mubr.f32.gmra.mrb[0].mxu0 %v909
    %v1185 = vpop.f32.mrb[0].mxu0
    %v1186 = vadd.f32 0.0, %v1185
    %v1187 = vpop.f32.mrb[0].mxu0
    %1188 = vmatprep.mubr.f32.mxu0 0.0
    %1189 = vmatmul.mubr.f32.gmra.mrb[0].mxu0 %v912
    %v1190 = vpop.f32.mrb[0].mxu0
    %v1191 = vadd.f32 0.0, %v1190
    %v1192 = vpop.f32.mrb[0].mxu0
    %1193 = vmatprep.mubr.f32.mxu0 0.0
    %1194 = vmatmul.mubr.f32.gmra.mrb[0].mxu0 %v915
    %v1195 = vpop.f32.mrb[0].mxu0
    %v1196 = vadd.f32 0.0, %v1195
    %v1197 = vpop.f32.mrb[0].mxu0
    %1198 = vmatprep.mubr.f32.mxu0 0.0
    %1199 = vmatmul.mubr.f32.gmra.mrb[0].mxu0 %v918
    %v1200 = vpop.f32.mrb[0].mxu0
    %v1201 = vadd.f32 0.0, %v1200
    %v1202 = vpop.f32.mrb[0].mxu0
    %1203 = vmatprep.mubr.f32.mxu0 0.0
    %1204 = vmatmul.mubr.f32.gmra.mrb[0].mxu0 %v921
    %v1205 = vpop.f32.mrb[0].mxu0
    %v1206 = vadd.f32 0.0, %v1205
    %v1207 = vpop.f32.mrb[0].mxu0
    %1208 = vmatprep.mubr.f32.mxu0 0.0
    %1209 = vmatmul.mubr.f32.gmra.mrb[0].mxu0 %v924
    %v1210 = vpop.f32.mrb[0].mxu0
    %v1211 = vadd.f32 0.0, %v1210
    %v1212 = vpop.f32.mrb[0].mxu0
    %1213 = vmatprep.mubr.f32.mxu0 0.0
    %1214 = vmatmul.mubr.f32.gmra.mrb[0].mxu0 %v927
    %v1215 = vpop.f32.mrb[0].mxu0
    %v1216 = vadd.f32 0.0, %v1215
    %v1217 = vpop.f32.mrb[0].mxu0
    %1218 = vmatprep.mubr.f32.mxu0 0.0
    %1219 = vmatmul.mubr.f32.gmra.mrb[0].mxu0 %v930
    %v1220 = vpop.f32.mrb[0].mxu0
    %v1221 = vadd.f32 0.0, %v1220
    %v1222 = vpop.f32.mrb[0].mxu0
    %1223 = vmatprep.mubr.f32.mxu0 0.0
    %1224 = vmatmul.mubr.f32.gmra.mrb[0].mxu0 %v933
    %v1225 = vpop.f32.mrb[0].mxu0
    %v1226 = vadd.f32 0.0, %v1225
    %v1227 = vpop.f32.mrb[0].mxu0
    %1228 = vmatprep.mubr.f32.mxu0 0.0
    %1229 = vmatmul.mubr.f32.gmra.mrb[0].mxu0 %v936
    %v1230 = vpop.f32.mrb[0].mxu0
    %v1231 = vadd.f32 0.0, %v1230
    %v1232 = vpop.f32.mrb[0].mxu0
    %1233 = vmatprep.mubr.f32.mxu0 0.0
    %1234 = vmatmul.mubr.f32.gmra.mrb[0].mxu0 %v939
    %v1235 = vpop.f32.mrb[0].mxu0
    %v1236 = vadd.f32 0.0, %v1235
    %v1237 = vpop.f32.mrb[0].mxu0
    %1238 = vmatprep.mubr.f32.mxu0 0.0
    %1239 = vmatmul.mubr.f32.gmra.mrb[0].mxu0 %v942
    %v1240 = vpop.f32.mrb[0].mxu0
    %v1241 = vadd.f32 0.0, %v1240
    %v1242 = vpop.f32.mrb[0].mxu0
    %1243 = vmatprep.mubr.f32.mxu0 0.0
    %1244 = vmatmul.mubr.f32.gmra.mrb[0].mxu0 %v945
    %v1245 = vpop.f32.mrb[0].mxu0
    %v1246 = vadd.f32 0.0, %v1245
    %v1247 = vpop.f32.mrb[0].mxu0
    %1248 = vmatprep.mubr.f32.mxu0 0.0
    %1249 = vmatmul.mubr.f32.gmra.mrb[0].mxu0 %v948
    %v1250 = vpop.f32.mrb[0].mxu0
    %v1251 = vadd.f32 0.0, %v1250
    %v1252 = vpop.f32.mrb[0].mxu0
    %1253 = vmatprep.mubr.f32.mxu0 0.0
    %1254 = vmatmul.mubr.f32.gmra.mrb[0].mxu0 %v951
    %v1255 = vpop.f32.mrb[0].mxu0
    %v1256 = vadd.f32 0.0, %v1255
    %v1257 = vpop.f32.mrb[0].mxu0
    %1258 = vdwg.mxu0
    %v1259 = vmax.f32 %v1020, 0.0
    %v1260 = vmax.f32 %v1022, 0.0
    %v1261 = vmax.f32 %v1181, 0.0
    %v1262 = vmax.f32 %v1026, 0.0
    %v1263 = vmax.f32 %v1028, 0.0
    %v1264 = vmax.f32 %v1186, 0.0
    %v1265 = vmax.f32 %v1032, 0.0
    %v1266 = vmax.f32 %v1034, 0.0
    %v1267 = vmax.f32 %v1191, 0.0
    %v1268 = vmax.f32 %v1038, 0.0
    %v1269 = vmax.f32 %v1040, 0.0
    %v1270 = vmax.f32 %v1196, 0.0
    %v1271 = vmax.f32 %v1044, 0.0
    %v1272 = vmax.f32 %v1046, 0.0
    %v1273 = vmax.f32 %v1201, 0.0
    %v1274 = vmax.f32 %v1050, 0.0
    %v1275 = vmax.f32 %v1052, 0.0
    %v1276 = vmax.f32 %v1206, 0.0
    %v1277 = vmax.f32 %v1056, 0.0
    %v1278 = vmax.f32 %v1058, 0.0
    %v1279 = vmax.f32 %v1211, 0.0
    %v1280 = vmax.f32 %v1062, 0.0
    %v1281 = vmax.f32 %v1064, 0.0
    %v1282 = vmax.f32 %v1216, 0.0
    %v1283 = vmax.f32 %v1068, 0.0
    %v1284 = vmax.f32 %v1070, 0.0
    %v1285 = vmax.f32 %v1221, 0.0
    %v1286 = vmax.f32 %v1074, 0.0
    %v1287 = vmax.f32 %v1076, 0.0
    %v1288 = vmax.f32 %v1226, 0.0
    %v1289 = vmax.f32 %v1080, 0.0
    %v1290 = vmax.f32 %v1082, 0.0
    %v1291 = vmax.f32 %v1231, 0.0
    %v1292 = vmax.f32 %v1086, 0.0
    %v1293 = vmax.f32 %v1088, 0.0
    %v1294 = vmax.f32 %v1236, 0.0
    %v1295 = vmax.f32 %v1092, 0.0
    %v1296 = vmax.f32 %v1094, 0.0
    %v1297 = vmax.f32 %v1241, 0.0
    %v1298 = vmax.f32 %v1098, 0.0
    %v1299 = vmax.f32 %v1100, 0.0
    %v1300 = vmax.f32 %v1246, 0.0
    %v1301 = vmax.f32 %v1104, 0.0
    %v1302 = vmax.f32 %v1106, 0.0
    %v1303 = vmax.f32 %v1251, 0.0
    %v1304 = vmax.f32 %v1110, 0.0
    %v1305 = vmax.f32 %v1112, 0.0
    %v1306 = vmax.f32 %v1256, 0.0
    %v1307 = vmin.f32 %v1259, %v1265
    %v1308 = vmin.f32 %v1262, %v1268
    %v1309 = vmin.f32 %v1307, %v1271
    %v1310 = vmin.f32 %v1308, %v1274
    %v1311 = vmin.f32 %v1309, %v1277
    %v1312 = vmin.f32 %v1310, %v1280
    %v1313 = vmin.f32 %v1311, %v1283
    %v1314 = vmin.f32 %v1312, %v1286
    %v1315 = vmin.f32 %v1313, %v1289
    %v1316 = vmin.f32 %v1314, %v1292
    %v1317 = vmin.f32 %v1315, %v1295
    %v1318 = vmin.f32 %v1316, %v1298
    %v1319 = vmin.f32 %v1317, %v1301
    %v1320 = vmin.f32 %v1318, %v1304
    %v1321 = vmin.f32 %v1319, %v1320
    %v1322 = vrot.slane %v1321, 4
    %v1323 = vmin.f32 %v1321, %v1322
    %v1324 = vrot.slane %v1323, 2
    %v1325 = vmin.f32 %v1323, %v1324
    %v1326 = vrot.slane %v1325, 1
    %v1327 = vmin.f32 %v1325, %v1326
    %v1328 = vmin.f32 %v1260, %v1266
    %v1329 = vmin.f32 %v1263, %v1269
    %v1330 = vmin.f32 %v1328, %v1272
    %v1331 = vmin.f32 %v1329, %v1275
    %v1332 = vmin.f32 %v1330, %v1278
    %v1333 = vmin.f32 %v1331, %v1281
    %v1334 = vmin.f32 %v1332, %v1284
    %v1335 = vmin.f32 %v1333, %v1287
    %v1336 = vmin.f32 %v1334, %v1290
    %v1337 = vmin.f32 %v1335, %v1293
    %v1338 = vmin.f32 %v1336, %v1296
    %v1339 = vmin.f32 %v1337, %v1299
    %v1340 = vmin.f32 %v1338, %v1302
    %v1341 = vmin.f32 %v1339, %v1305
    %v1342 = vmin.f32 %v1340, %v1341
    %v1343 = vrot.slane %v1342, 4
    %v1344 = vmin.f32 %v1342, %v1343
    %v1345 = vrot.slane %v1344, 2
    %v1346 = vmin.f32 %v1344, %v1345
    %v1347 = vrot.slane %v1346, 1
    %v1348 = vmin.f32 %v1346, %v1347
    %v1349 = vmin.f32 %v1261, %v1267
    %v1350 = vmin.f32 %v1264, %v1270
    %v1351 = vmin.f32 %v1349, %v1273
    %v1352 = vmin.f32 %v1350, %v1276
    %v1353 = vmin.f32 %v1351, %v1279
    %v1354 = vmin.f32 %v1352, %v1282
    %v1355 = vmin.f32 %v1353, %v1285
    %v1356 = vmin.f32 %v1354, %v1288
    %v1357 = vmin.f32 %v1355, %v1291
    %v1358 = vmin.f32 %v1356, %v1294
    %v1359 = vmin.f32 %v1357, %v1297
    %v1360 = vmin.f32 %v1358, %v1300
    %v1361 = vmin.f32 %v1359, %v1303
    %v1362 = vmin.f32 %v1360, %v1306
    %v1363 = vmin.f32 %v1361, %v1362
    %v1364 = vrot.slane %v1363, 4
    %v1365 = vmin.f32 %v1363, %v1364
    %v1366 = vrot.slane %v1365, 2
    %v1367 = vmin.f32 %v1365, %v1366
    %v1368 = vrot.slane %v1367, 1
    %v1369 = vmin.f32 %v1367, %v1368
    %v1370 = vadd.f32 %v634, %v1327
    %v1371 = vadd.f32 %v635, %v1348
    %v1372 = vadd.f32 %v636, %v1369
    %1373 = vmin.xlane.f32.xlu0 %v1259
    %v1374 = vpop.xlane.xlu0 %1373
    %1375 = vmin.xlane.f32.xlu0 %v1262
    %v1376 = vpop.xlane.xlu0 %1375
    %1377 = vmin.xlane.f32.xlu0 %v1265
    %v1378 = vpop.xlane.xlu0 %1377
    %1379 = vmin.xlane.f32.xlu0 %v1268
    %v1380 = vpop.xlane.xlu0 %1379
    %1381 = vmin.xlane.f32.xlu0 %v1271
    %v1382 = vpop.xlane.xlu0 %1381
    %1383 = vmin.xlane.f32.xlu0 %v1274
    %v1384 = vpop.xlane.xlu0 %1383
    %1385 = vmin.xlane.f32.xlu0 %v1277
    %v1386 = vpop.xlane.xlu0 %1385
    %1387 = vmin.xlane.f32.xlu0 %v1280
    %v1388 = vpop.xlane.xlu0 %1387
    %1389 = vmin.xlane.f32.xlu0 %v1283
    %v1390 = vpop.xlane.xlu0 %1389
    %1391 = vmin.xlane.f32.xlu0 %v1286
    %v1392 = vpop.xlane.xlu0 %1391
    %1393 = vmin.xlane.f32.xlu0 %v1289
    %v1394 = vpop.xlane.xlu0 %1393
    %1395 = vmin.xlane.f32.xlu0 %v1292
    %v1396 = vpop.xlane.xlu0 %1395
    %1397 = vmin.xlane.f32.xlu0 %v1295
    %v1398 = vpop.xlane.xlu0 %1397
    %1399 = vmin.xlane.f32.xlu0 %v1298
    %v1400 = vpop.xlane.xlu0 %1399
    %1401 = vmin.xlane.f32.xlu0 %v1301
    %v1402 = vpop.xlane.xlu0 %1401
    %1403 = vmin.xlane.f32.xlu0 %v1304
    %v1404 = vpop.xlane.xlu0 %1403
    %v1405 = vadd.f32 %v765, %v1374
    %v1406 = vadd.f32 %v766, %v1376
    %v1407 = vadd.f32 %v767, %v1378
    %v1408 = vadd.f32 %v768, %v1380
    %v1409 = vadd.f32 %v769, %v1382
    %v1410 = vadd.f32 %v770, %v1384
    %v1411 = vadd.f32 %v771, %v1386
    %v1412 = vadd.f32 %v772, %v1388
    %v1413 = vadd.f32 %v773, %v1390
    %v1414 = vadd.f32 %v774, %v1392
    %v1415 = vadd.f32 %v775, %v1394
    %v1416 = vadd.f32 %v776, %v1396
    %v1417 = vadd.f32 %v777, %v1398
    %v1418 = vadd.f32 %v778, %v1400
    %v1419 = vadd.f32 %v779, %v1402
    %v1420 = vadd.f32 %v780, %v1404
    %1421 = vmin.xlane.f32.xlu0 %v1260
    %v1422 = vpop.xlane.xlu0 %1421
    %1423 = vmin.xlane.f32.xlu0 %v1263
    %v1424 = vpop.xlane.xlu0 %1423
    %1425 = vmin.xlane.f32.xlu0 %v1266
    %v1426 = vpop.xlane.xlu0 %1425
    %1427 = vmin.xlane.f32.xlu0 %v1269
    %v1428 = vpop.xlane.xlu0 %1427
    %1429 = vmin.xlane.f32.xlu0 %v1272
    %v1430 = vpop.xlane.xlu0 %1429
    %1431 = vmin.xlane.f32.xlu0 %v1275
    %v1432 = vpop.xlane.xlu0 %1431
    %1433 = vmin.xlane.f32.xlu0 %v1278
    %v1434 = vpop.xlane.xlu0 %1433
    %1435 = vmin.xlane.f32.xlu0 %v1281
    %v1436 = vpop.xlane.xlu0 %1435
    %1437 = vmin.xlane.f32.xlu0 %v1284
    %v1438 = vpop.xlane.xlu0 %1437
    %1439 = vmin.xlane.f32.xlu0 %v1287
    %v1440 = vpop.xlane.xlu0 %1439
    %1441 = vmin.xlane.f32.xlu0 %v1290
    %v1442 = vpop.xlane.xlu0 %1441
    %1443 = vmin.xlane.f32.xlu0 %v1293
    %v1444 = vpop.xlane.xlu0 %1443
    %1445 = vmin.xlane.f32.xlu0 %v1296
    %v1446 = vpop.xlane.xlu0 %1445
    %1447 = vmin.xlane.f32.xlu0 %v1299
    %v1448 = vpop.xlane.xlu0 %1447
    %1449 = vmin.xlane.f32.xlu0 %v1302
    %v1450 = vpop.xlane.xlu0 %1449
    %1451 = vmin.xlane.f32.xlu0 %v1305
    %v1452 = vpop.xlane.xlu0 %1451
    %v1453 = vadd.f32 %v1405, %v1422
    %v1454 = vadd.f32 %v1406, %v1424
    %v1455 = vadd.f32 %v1407, %v1426
    %v1456 = vadd.f32 %v1408, %v1428
    %v1457 = vadd.f32 %v1409, %v1430
    %v1458 = vadd.f32 %v1410, %v1432
    %v1459 = vadd.f32 %v1411, %v1434
    %v1460 = vadd.f32 %v1412, %v1436
    %v1461 = vadd.f32 %v1413, %v1438
    %v1462 = vadd.f32 %v1414, %v1440
    %v1463 = vadd.f32 %v1415, %v1442
    %v1464 = vadd.f32 %v1416, %v1444
    %v1465 = vadd.f32 %v1417, %v1446
    %v1466 = vadd.f32 %v1418, %v1448
    %v1467 = vadd.f32 %v1419, %v1450
    %v1468 = vadd.f32 %v1420, %v1452
    %1469 = vmin.xlane.f32.xlu0 %v1261
    %v1470 = vpop.xlane.xlu0 %1469
    %1471 = vmin.xlane.f32.xlu0 %v1264
    %v1472 = vpop.xlane.xlu0 %1471
    %1473 = vmin.xlane.f32.xlu0 %v1267
    %v1474 = vpop.xlane.xlu0 %1473
    %1475 = vmin.xlane.f32.xlu0 %v1270
    %v1476 = vpop.xlane.xlu0 %1475
    %1477 = vmin.xlane.f32.xlu0 %v1273
    %v1478 = vpop.xlane.xlu0 %1477
    %1479 = vmin.xlane.f32.xlu0 %v1276
    %v1480 = vpop.xlane.xlu0 %1479
    %1481 = vmin.xlane.f32.xlu0 %v1279
    %v1482 = vpop.xlane.xlu0 %1481
    %1483 = vmin.xlane.f32.xlu0 %v1282
    %v1484 = vpop.xlane.xlu0 %1483
    %1485 = vmin.xlane.f32.xlu0 %v1285
    %v1486 = vpop.xlane.xlu0 %1485
    %1487 = vmin.xlane.f32.xlu0 %v1288
    %v1488 = vpop.xlane.xlu0 %1487
    %1489 = vmin.xlane.f32.xlu0 %v1291
    %v1490 = vpop.xlane.xlu0 %1489
    %1491 = vmin.xlane.f32.xlu0 %v1294
    %v1492 = vpop.xlane.xlu0 %1491
    %1493 = vmin.xlane.f32.xlu0 %v1297
    %v1494 = vpop.xlane.xlu0 %1493
    %1495 = vmin.xlane.f32.xlu0 %v1300
    %v1496 = vpop.xlane.xlu0 %1495
    %1497 = vmin.xlane.f32.xlu0 %v1303
    %v1498 = vpop.xlane.xlu0 %1497
    %1499 = vmin.xlane.f32.xlu0 %v1306
    %v1500 = vpop.xlane.xlu0 %1499
    %v1501 = vadd.f32 %v1453, %v1470
    %v1502 = vadd.f32 %v1454, %v1472
    %v1503 = vadd.f32 %v1455, %v1474
    %v1504 = vadd.f32 %v1456, %v1476
    %v1505 = vadd.f32 %v1457, %v1478
    %v1506 = vadd.f32 %v1458, %v1480
    %v1507 = vadd.f32 %v1459, %v1482
    %v1508 = vadd.f32 %v1460, %v1484
    %v1509 = vadd.f32 %v1461, %v1486
    %v1510 = vadd.f32 %v1462, %v1488
    %v1511 = vadd.f32 %v1463, %v1490
    %v1512 = vadd.f32 %v1464, %v1492
    %v1513 = vadd.f32 %v1465, %v1494
    %v1514 = vadd.f32 %v1466, %v1496
    %v1515 = vadd.f32 %v1467, %v1498
    %v1516 = vadd.f32 %v1468, %v1500
    %vm1517 = vcmask 7168
    %v1518 = vsel %vm1517, %v1501, 0.0
    %v1519 = vsel %vm1517, %v1502, 0.0
    %v1520 = vadd.f32 %v1518, %v1519
    %v1521 = vsel %vm1517, %v1503, 0.0
    %v1522 = vadd.f32 %v1520, %v1521
    %v1523 = vsel %vm1517, %v1504, 0.0
    %v1524 = vadd.f32 %v1522, %v1523
    %v1525 = vsel %vm1517, %v1505, 0.0
    %v1526 = vadd.f32 %v1524, %v1525
    %v1527 = vsel %vm1517, %v1506, 0.0
    %v1528 = vadd.f32 %v1526, %v1527
    %v1529 = vsel %vm1517, %v1507, 0.0
    %v1530 = vadd.f32 %v1528, %v1529
    %v1531 = vsel %vm1517, %v1508, 0.0
    %v1532 = vadd.f32 %v1530, %v1531
    %v1533 = vsel %vm1517, %v1509, 0.0
    %v1534 = vadd.f32 %v1532, %v1533
    %v1535 = vsel %vm1517, %v1510, 0.0
    %v1536 = vadd.f32 %v1534, %v1535
    %v1537 = vsel %vm1517, %v1511, 0.0
    %v1538 = vadd.f32 %v1536, %v1537
    %v1539 = vsel %vm1517, %v1512, 0.0
    %v1540 = vadd.f32 %v1538, %v1539
    %v1541 = vsel %vm1517, %v1513, 0.0
    %v1542 = vadd.f32 %v1540, %v1541
    %v1543 = vsel %vm1517, %v1514, 0.0
    %v1544 = vadd.f32 %v1542, %v1543
    %v1545 = vsel %vm1517, %v1515, 0.0
    %v1546 = vadd.f32 %v1544, %v1545
    %v1547 = vsel %vm1517, %v1516, 0.0
    %v1548 = vadd.f32 %v1546, %v1547
    %1549 = vadd.xlane.f32.xlu0 %v1548
    %v1550 = vpop.xlane.xlu0 %1549
    %v1551 = vrot.slane %v1550, 4
    %v1552 = vadd.f32 %v1550, %v1551
    %v1553 = vrot.slane %v1552, 2
    %v1554 = vadd.f32 %v1552, %v1553
    %v1555 = vrot.slane %v1554, 1
    %v1556 = vadd.f32 %v1554, %v1555
    %s1557 = vtos %v1556
    %vm1558 = vcmask 1040384
    %v1559 = vsel %vm1558, %v1370, 0.0
    %v1560 = vsel %vm1558, %v1371, 0.0
    %v1561 = vadd.f32 %v1559, %v1560
    %v1562 = vsel %vm1558, %v1372, 0.0
    %v1563 = vadd.f32 %v1561, %v1562
    %1564 = vadd.xlane.f32.xlu0 %v1563
    %v1565 = vpop.xlane.xlu0 %1564
    %v1566 = vrot.slane %v1565, 4
    %v1567 = vadd.f32 %v1565, %v1566
    %v1568 = vrot.slane %v1567, 2
    %v1569 = vadd.f32 %v1567, %v1568
    %v1570 = vrot.slane %v1569, 1
    %v1571 = vadd.f32 %v1569, %v1570
    %s1572 = vtos %v1571
    %s1573 = sadd.f32 %s1557, %s1572
    %s1574 = smul.f32 %s1573, 0.00390625
    %v1575 = vstv %s1574
    %1576 = vst [vmem:[%s3] sm:$0x1] %v1575
    // Predicated region
    $region18: #{chamfer_loss.1} parent=1 // pred_check
      _
    $region19: #{chamfer_loss.1} parent=1 // pred_check_branch
      %1578 = sbr.rel (0) target = $region21
    $region20: #{chamfer_loss.1} parent=1 // pred_region
      _
    $region21: #{chamfer_loss.1} parent=1 // pred_fallthru
      _
    // Predicated region
    $region22: #{chamfer_loss.1} parent=1 // pred_check
      _
    $region23: #{chamfer_loss.1} parent=1 // pred_check_branch
      %1580 = sbr.rel (0) target = $region25
    $region24: #{chamfer_loss.1} parent=1 // pred_region
      _
    $region25: #{chamfer_loss.1} parent=1 // pred_fallthru
      _
    %1581 = vsyncpa [#allocation3], 1

</llo_original>
